<compile_context>
chip_gen: v6e
topology: v6e:2x2x1
jax: 0.10.0
libtpu: 0.0.40
codegen_flags: <defaults>
</compile_context>

<pallas_src>
import functools

import jax
import jax.numpy as jnp
import numpy as np
from jax.experimental import pallas as pl
from jax.experimental.pallas import tpu as pltpu


# ----------------------------- in-kernel helpers -------------------------------------------

def _prelu(v, a):
    # a has shape (1, 1): broadcast multiply, no scalar extraction from VMEM needed.
    return jnp.where(v >= 0, v, a * v)


def _partial_stats(y):
    # per-channel (sum, sum_sq) over the lane (spatial) axis of this image -> (C, 2)
    return jnp.concatenate(
        [jnp.sum(y, axis=-1, keepdims=True),
         jnp.sum(y * y, axis=-1, keepdims=True)], axis=-1)


# ----------------------------- kernels ------------------------------------------------------

def conv1x1_stats_kernel(x_ref, w_ref, y_ref, st_ref):
    """K1: y = W_in @ x  (1x1 conv, no bias) + per-image BN partial stats."""
    x = x_ref[0]                                               # (Cin, HW)
    y = jnp.dot(w_ref[...], x, preferred_element_type=jnp.float32)   # (Cint, HW)  MXU
    y_ref[0] = y
    st_ref[0] = _partial_stats(y)


def bn_act_conv3x3_kernel(x_ref, sc_ref, sh_ref, a_ref, w_ref, b_ref, m_ref,
                          y_ref, st_ref, *, W, dilation):
    """K2: BN1(affine) + PReLU + 3x3 conv (bias) as ONE stacked MXU matmul + BN2 stats.

    Taps are static lane shifts of the flattened HW axis; precomputed {0,1} masks
    (m_ref, (9, HW)) reproduce zero padding and kill the cyclic wrap of the roll.
    """
    x = x_ref[0] * sc_ref[...] + sh_ref[...]                   # BN affine   (Cint, HW)
    x = _prelu(x, a_ref[...])                                  # PReLU

    taps = []
    k = 0
    for dy in (-1, 0, 1):
        for dx in (-1, 0, 1):
            s = (dy * W + dx) * dilation                       # lane offset of this tap
            # shifted[:, i] = x[:, i + s] (cyclic).
            # TODO(synk): pltpu.roll would map this to the XLU explicitly; jnp.roll is kept
            # for maximum lowering robustness (cost is in-VMEM only, kernel is HBM-bound).
            shifted = x if s == 0 else jnp.roll(x, -s, axis=1)
            tap = shifted if (dy == 0 and dx == 0) else shifted * m_ref[k:k + 1, :]
            taps.append(tap)
            k += 1
    tap_stack = jnp.concatenate(taps, axis=0)                  # (9*Cint, HW)
    y = jnp.dot(w_ref[...], tap_stack,                         # (Cint, 9*Cint) @ (9*Cint, HW)
                preferred_element_type=jnp.float32) + b_ref[...]
    y_ref[0] = y
    st_ref[0] = _partial_stats(y)


def bn_act_conv1x1_stats_kernel(x_ref, sc_ref, sh_ref, a_ref, w_ref, y_ref, st_ref):
    """K3: BN2(affine) + PReLU + output 1x1 conv (no bias) + BN3 partial stats."""
    x = x_ref[0] * sc_ref[...] + sh_ref[...]
    x = _prelu(x, a_ref[...])
    y = jnp.dot(w_ref[...], x, preferred_element_type=jnp.float32)   # (Cout, HW)
    y_ref[0] = y
    st_ref[0] = _partial_stats(y)


def bn_add_prelu_kernel(y_ref, sc_ref, sh_ref, x_ref, a_ref, o_ref, *, rep):
    """K4: BN3(affine) + Dropout2d(identity) + other-path add (channel repeat) + PReLU."""
    z = y_ref[0] * sc_ref[...] + sh_ref[...]                   # (Cout, HW)
    # TODO(synk): training-mode Dropout2d with p > 0 needs per-(n, c) RNG channel masking;
    # treated as identity here (p == 0 / eval semantics).
    other = x_ref[0]                                           # (Cin, HW)
    if rep > 1:                                                # torch .repeat(1, rep, 1, 1)
        other = jnp.concatenate([other] * rep, axis=0)         # (Cout, HW)
    o_ref[0] = _prelu(z + other, a_ref[...])


# ----------------------------- wrapper ------------------------------------------------------

def _finalize_bn(partial_stats, gamma, beta, count, eps):
    """Fold per-image (sum, sum_sq) partials into per-channel BN scale/shift (training mode)."""
    s = jnp.sum(partial_stats, axis=0)                         # (C, 2)
    mean = s[:, 0] / count
    var = jnp.maximum(s[:, 1] / count - mean * mean, 0.0)      # biased var (PyTorch BN fwd)
    inv = jax.lax.rsqrt(var + eps)
    scale = gamma * inv
    shift = beta - mean * scale
    return (scale.reshape(-1, 1).astype(jnp.float32),
            shift.reshape(-1, 1).astype(jnp.float32))


def enet_encoder_module(x_nchw, params, *, eps=1e-3, downsample=False, dilated=None,
                        dropout_prob=0.0):
    """Mirror of EnetEncoderModule.forward (training-mode BN, fresh-module semantics)."""
    if downsample:
        # TODO(synk): downsample=True (2x2/stride-2 input conv + MaxPool2d other path) is not
        # implemented in this kernel set.
        raise NotImplementedError("downsample=True is not supported by this Pallas kernel")

    N, Cin, H, W = x_nchw.shape
    Cint = params['w_in'].shape[0]
    Cout = params['w_out'].shape[0]
    HW = H * W
    rep = Cout // Cin
    assert rep * Cin == Cout, "output_channels must be a multiple of input_channels"
    dilation = 1 if not dilated else int(dilated)
    count = float(N * HW)

    # Layout plumbing only: free reshapes (NCHW is already (C, H*W)-contiguous per image).
    x3 = x_nchw.reshape(N, Cin, HW).astype(jnp.float32)
    w_in = params['w_in'].astype(jnp.float32)                               # (Cint, Cin)
    # 3x3 weights stacked along the contraction axis: column block k = ky*3+kx holds the
    # (Cint, Cint) matrix of tap (ky, kx)  ->  single MXU matmul per image in K2.
    w_mid_stacked = jnp.transpose(params['w_mid'], (0, 2, 3, 1)).reshape(Cint, 9 * Cint)
    w_mid_stacked = w_mid_stacked.astype(jnp.float32)
    b_mid = params['b_mid'].reshape(Cint, 1).astype(jnp.float32)
    w_out = params['w_out'].astype(jnp.float32)                             # (Cout, Cint)
    a_in = jnp.asarray(params['a_in'], jnp.float32).reshape(1, 1)
    a_mid = jnp.asarray(params['a_mid'], jnp.float32).reshape(1, 1)
    a_f = jnp.asarray(params['a_f'], jnp.float32).reshape(1, 1)

    # Precomputed boundary masks for the 9 taps (host-side constants, (9, HW) f32): removes
    # all iota / integer div / mod work from the kernel; tap order matches w_mid_stacked.
    pos = np.arange(HW)
    hh, ww = pos // W, pos % W
    mask_rows = []
    for dy in (-1, 0, 1):
        for dx in (-1, 0, 1):
            oy, ox = dy * dilation, dx * dilation
            mask_rows.append((hh + oy >= 0) & (hh + oy < H) & (ww + ox >= 0) & (ww + ox < W))
    tap_masks = jnp.asarray(np.stack(mask_rows).astype(np.float32))         # (9, HW)

    cp = pltpu.CompilerParams(dimension_semantics=("parallel",))

    def img_spec(c):
        return pl.BlockSpec((1, c, HW), lambda n: (n, 0, 0))

    def stat_spec(c):
        return pl.BlockSpec((1, c, 2), lambda n: (n, 0, 0))

    # ---- K1: input 1x1 conv + stats -------------------------------------------------------
    y1, st1 = pl.pallas_call(
        conv1x1_stats_kernel,
        out_shape=(jax.ShapeDtypeStruct((N, Cint, HW), jnp.float32),
                   jax.ShapeDtypeStruct((N, Cint, 2), jnp.float32)),
        grid=(N,),
        in_specs=[img_spec(Cin),
                  pl.BlockSpec((Cint, Cin), lambda n: (0, 0))],
        out_specs=(img_spec(Cint), stat_spec(Cint)),
        compiler_params=cp,
    )(x3, w_in)
    sc1, sh1 = _finalize_bn(st1, params['g1'], params['b1'], count, eps)

    # ---- K2: BN1 + PReLU + 3x3 conv (stacked matmul) + stats -------------------------------
    y2, st2 = pl.pallas_call(
        functools.partial(bn_act_conv3x3_kernel, W=W, dilation=dilation),
        out_shape=(jax.ShapeDtypeStruct((N, Cint, HW), jnp.float32),
                   jax.ShapeDtypeStruct((N, Cint, 2), jnp.float32)),
        grid=(N,),
        in_specs=[img_spec(Cint),
                  pl.BlockSpec((Cint, 1), lambda n: (0, 0)),
                  pl.BlockSpec((Cint, 1), lambda n: (0, 0)),
                  pl.BlockSpec((1, 1), lambda n: (0, 0)),
                  pl.BlockSpec((Cint, 9 * Cint), lambda n: (0, 0)),
                  pl.BlockSpec((Cint, 1), lambda n: (0, 0)),
                  pl.BlockSpec((9, HW), lambda n: (0, 0))],
        out_specs=(img_spec(Cint), stat_spec(Cint)),
        compiler_params=cp,
    )(y1, sc1, sh1, a_in, w_mid_stacked, b_mid, tap_masks)
    sc2, sh2 = _finalize_bn(st2, params['g2'], params['b2'], count, eps)

    # ---- K3: BN2 + PReLU + output 1x1 conv + stats -----------------------------------------
    y3, st3 = pl.pallas_call(
        bn_act_conv1x1_stats_kernel,
        out_shape=(jax.ShapeDtypeStruct((N, Cout, HW), jnp.float32),
                   jax.ShapeDtypeStruct((N, Cout, 2), jnp.float32)),
        grid=(N,),
        in_specs=[img_spec(Cint),
                  pl.BlockSpec((Cint, 1), lambda n: (0, 0)),
                  pl.BlockSpec((Cint, 1), lambda n: (0, 0)),
                  pl.BlockSpec((1, 1), lambda n: (0, 0)),
                  pl.BlockSpec((Cout, Cint), lambda n: (0, 0))],
        out_specs=(img_spec(Cout), stat_spec(Cout)),
        compiler_params=cp,
    )(y2, sc2, sh2, a_mid, w_out)
    sc3, sh3 = _finalize_bn(st3, params['g3'], params['b3'], count, eps)

    # ---- K4: BN3 + dropout(identity) + residual add (channel repeat) + final PReLU ---------
    out = pl.pallas_call(
        functools.partial(bn_add_prelu_kernel, rep=rep),
        out_shape=jax.ShapeDtypeStruct((N, Cout, HW), jnp.float32),
        grid=(N,),
        in_specs=[img_spec(Cout),
                  pl.BlockSpec((Cout, 1), lambda n: (0, 0)),
                  pl.BlockSpec((Cout, 1), lambda n: (0, 0)),
                  img_spec(Cin),
                  pl.BlockSpec((1, 1), lambda n: (0, 0))],
        out_specs=img_spec(Cout),
        compiler_params=cp,
    )(y3, sc3, sh3, x3, a_f)

    return out.reshape(N, Cout, H, W)


# ----------------------------- pure-JAX reference -------------------------------------------

def _reference(x, p, eps, rep):
    def bn(y, g, b):
        mean = jnp.mean(y, axis=(0, 2, 3), keepdims=True)
        var = jnp.mean((y - mean) ** 2, axis=(0, 2, 3), keepdims=True)
        return ((y - mean) * jax.lax.rsqrt(var + eps) * g[None, :, None, None]
                + b[None, :, None, None])

    def prelu(y, a):
        return jnp.where(y >= 0, y, a * y)

    y = jnp.einsum('oi,nihw->nohw', p['w_in'], x)
    y = prelu(bn(y, p['g1'], p['b1']), p['a_in'])
    y = jax.lax.conv_general_dilated(
        y, p['w_mid'], window_strides=(1, 1), padding=((1, 1), (1, 1)),
        dimension_numbers=('NCHW', 'OIHW', 'NCHW'))
    y = y + p['b_mid'][None, :, None, None]
    y = prelu(bn(y, p['g2'], p['b2']), p['a_mid'])
    y = jnp.einsum('oi,nihw->nohw', p['w_out'], y)
    y = bn(y, p['g3'], p['b3'])
    other = x if rep == 1 else jnp.concatenate([x] * rep, axis=1)
    return prelu(y + other, p['a_f'])


# ----------------------------- main ----------------------------------------------------------

if __name__ == "__main__":
    N, Cin, Cout, H, W = 2, 4, 8, 16, 16
    internal_scale = 2
    Cint = Cout // internal_scale       # internal_channels = output_channels // internal_scale

    keys = jax.random.split(jax.random.PRNGKey(0), 11)
    x = jax.random.normal(keys[0], (N, Cin, H, W), jnp.float32)
    params = dict(
        # PyTorch conv weights are (Cout, Cin, 1, 1) / (Cout, Cin, 3, 3); 1x1s stored squeezed.
        w_in=0.3 * jax.random.normal(keys[1], (Cint, Cin), jnp.float32),
        g1=1.0 + 0.1 * jax.random.normal(keys[2], (Cint,), jnp.float32),
        b1=0.1 * jax.random.normal(keys[3], (Cint,), jnp.float32),
        a_in=jnp.float32(0.25),                                   # nn.PReLU() default
        w_mid=0.2 * jax.random.normal(keys[4], (Cint, Cint, 3, 3), jnp.float32),
        b_mid=0.1 * jax.random.normal(keys[5], (Cint,), jnp.float32),
        g2=1.0 + 0.1 * jax.random.normal(keys[6], (Cint,), jnp.float32),
        b2=0.1 * jax.random.normal(keys[7], (Cint,), jnp.float32),
        a_mid=jnp.float32(0.25),
        w_out=0.3 * jax.random.normal(keys[8], (Cout, Cint), jnp.float32),
        g3=1.0 + 0.1 * jax.random.normal(keys[9], (Cout,), jnp.float32),
        b3=0.1 * jax.random.normal(keys[10], (Cout,), jnp.float32),
        a_f=jnp.float32(0.25),
    )

    run = jax.jit(lambda xx, pp: enet_encoder_module(xx, pp, eps=1e-3, downsample=False,
                                                     dilated=None, dropout_prob=0.0))
    out = jax.block_until_ready(run(x, params))

    ref = _reference(x, params, 1e-3, rep=Cout // Cin)
    assert out.shape == (N, Cout, H, W), out.shape
    np.testing.assert_allclose(np.asarray(out), np.asarray(ref), rtol=2e-3, atol=2e-3)

    print("KERNEL_OK")
</pallas_src>

<mosaic_0001>
module attributes {stable_mosaic.version = 11 : i64} {
  func.func @conv1x1_stats_kernel(%arg0: i32, %arg1: memref<1x4x256xf32, #tpu.memory_space<vmem>>, %arg2: memref<4x4xf32, #tpu.memory_space<vmem>>, %arg3: memref<1x4x256xf32, #tpu.memory_space<vmem>>, %arg4: memref<1x4x2xf32, #tpu.memory_space<vmem>>) attributes {dimension_semantics = [#tpu.dimension_semantics<parallel>], iteration_bounds = array<i64: 2>, scalar_prefetch = 0 : i64, scratch_operands = 0 : i64, tpu.core_type = #tpu.core_type<tc>, window_params = [{transform_indices = @transform_0, window_bounds = array<i64: 1, 4, 256>}, {pipeline_mode = #tpu.pipeline_mode<synchronous>, transform_indices = @transform_1, window_bounds = array<i64: 4, 4>}, {transform_indices = @transform_2, window_bounds = array<i64: 1, 4, 256>}, {transform_indices = @transform_3, window_bounds = array<i64: 1, 4, 2>}]} {
    %c0 = arith.constant 0 : index
    %c0_0 = arith.constant 0 : index
    %c0_1 = arith.constant 0 : index
    %0 = vector.load %arg1[%c0, %c0_0, %c0_1] : memref<1x4x256xf32, #tpu.memory_space<vmem>>, vector<1x4x256xf32>
    %1 = vector.shape_cast %0 : vector<1x4x256xf32> to vector<4x256xf32>
    %c0_2 = arith.constant 0 : index
    %c0_3 = arith.constant 0 : index
    %2 = vector.load %arg2[%c0_2, %c0_3] : memref<4x4xf32, #tpu.memory_space<vmem>>, vector<4x4xf32>
    %cst = arith.constant dense<0.000000e+00> : vector<4x256xf32>
    %3 = tpu.matmul %2, %1, %cst {dimension_numbers = #tpu.dot_dimension_numbers<[1], [0], [0], [1], [0, 0, 1, 1], [], []>} : vector<4x4xf32>, vector<4x256xf32>, vector<4x256xf32> -> vector<4x256xf32>
    %c0_4 = arith.constant 0 : index
    %c0_5 = arith.constant 0 : index
    %c0_6 = arith.constant 0 : index
    %4 = vector.load %arg3[%c0_4, %c0_5, %c0_6] : memref<1x4x256xf32, #tpu.memory_space<vmem>>, vector<1x4x256xf32>
    %5 = vector.shape_cast %4 : vector<1x4x256xf32> to vector<4x256xf32>
    %6 = vector.shape_cast %3 : vector<4x256xf32> to vector<1x4x256xf32>
    tpu.vector_store %arg3[%c0_4, %c0_5, %c0_6], %6 {strides = array<i32>} : memref<1x4x256xf32, #tpu.memory_space<vmem>>, vector<1x4x256xf32>,
    %cst_7 = arith.constant dense<0.000000e+00> : vector<4xf32>
    %7 = vector.multi_reduction <add>, %3, %cst_7 [1] : vector<4x256xf32> to vector<4xf32>
    %8 = vector.shape_cast %7 : vector<4xf32> to vector<4x1xf32>
    %9 = arith.mulf %3, %3 : vector<4x256xf32>
    %cst_8 = arith.constant dense<0.000000e+00> : vector<4xf32>
    %10 = vector.multi_reduction <add>, %9, %cst_8 [1] : vector<4x256xf32> to vector<4xf32>
    %11 = vector.shape_cast %10 : vector<4xf32> to vector<4x1xf32>
    %12 = tpu.concatenate %8, %11 in 1 : vector<4x1xf32>, vector<4x1xf32> -> vector<4x2xf32>
    %c0_9 = arith.constant 0 : index
    %c0_10 = arith.constant 0 : index
    %c0_11 = arith.constant 0 : index
    %13 = vector.load %arg4[%c0_9, %c0_10, %c0_11] : memref<1x4x2xf32, #tpu.memory_space<vmem>>, vector<1x4x2xf32>
    %14 = vector.shape_cast %13 : vector<1x4x2xf32> to vector<4x2xf32>
    %15 = vector.shape_cast %12 : vector<4x2xf32> to vector<1x4x2xf32>
    tpu.vector_store %arg4[%c0_9, %c0_10, %c0_11], %15 {strides = array<i32>} : memref<1x4x2xf32, #tpu.memory_space<vmem>>, vector<1x4x2xf32>,
    return
  }
  func.func @transform_0(%arg0: i32) -> (i32, i32, i32) {
    %c0_i32 = arith.constant 0 : i32
    %c0_i32_0 = arith.constant 0 : i32
    %c0_i32_1 = arith.constant 0 : i32
    return %arg0, %c0_i32, %c0_i32_0 : i32, i32, i32
  }
  func.func @transform_1(%arg0: i32) -> (i32, i32) {
    %c0_i32 = arith.constant 0 : i32
    %c0_i32_0 = arith.constant 0 : i32
    %c0_i32_1 = arith.constant 0 : i32
    return %c0_i32, %c0_i32_0 : i32, i32
  }
  func.func @transform_2(%arg0: i32) -> (i32, i32, i32) {
    %c0_i32 = arith.constant 0 : i32
    %c0_i32_0 = arith.constant 0 : i32
    %c0_i32_1 = arith.constant 0 : i32
    return %arg0, %c0_i32, %c0_i32_0 : i32, i32, i32
  }
  func.func @transform_3(%arg0: i32) -> (i32, i32, i32) {
    %c0_i32 = arith.constant 0 : i32
    %c0_i32_0 = arith.constant 0 : i32
    %c0_i32_1 = arith.constant 0 : i32
    return %arg0, %c0_i32, %c0_i32_0 : i32, i32, i32
  }
}

module attributes {stable_mosaic.version = 11 : i64} {
  func.func @bn_act_conv1x1_stats_kernel(%arg0: i32, %arg1: memref<1x4x256xf32, #tpu.memory_space<vmem>>, %arg2: memref<4x1xf32, #tpu.memory_space<vmem>>, %arg3: memref<4x1xf32, #tpu.memory_space<vmem>>, %arg4: memref<1x1xf32, #tpu.memory_space<vmem>>, %arg5: memref<8x4xf32, #tpu.memory_space<vmem>>, %arg6: memref<1x8x256xf32, #tpu.memory_space<vmem>>, %arg7: memref<1x8x2xf32, #tpu.memory_space<vmem>>) attributes {dimension_semantics = [#tpu.dimension_semantics<parallel>], iteration_bounds = array<i64: 2>, scalar_prefetch = 0 : i64, scratch_operands = 0 : i64, tpu.core_type = #tpu.core_type<tc>, window_params = [{transform_indices = @transform_0, window_bounds = array<i64: 1, 4, 256>}, {pipeline_mode = #tpu.pipeline_mode<synchronous>, transform_indices = @transform_1, window_bounds = array<i64: 4, 1>}, {pipeline_mode = #tpu.pipeline_mode<synchronous>, transform_indices = @transform_2, window_bounds = array<i64: 4, 1>}, {pipeline_mode = #tpu.pipeline_mode<synchronous>, transform_indices = @transform_3, window_bounds = array<i64: 1, 1>}, {pipeline_mode = #tpu.pipeline_mode<synchronous>, transform_indices = @transform_4, window_bounds = array<i64: 8, 4>}, {transform_indices = @transform_5, window_bounds = array<i64: 1, 8, 256>}, {transform_indices = @transform_6, window_bounds = array<i64: 1, 8, 2>}]} {
    %c0 = arith.constant 0 : index
    %c0_0 = arith.constant 0 : index
    %c0_1 = arith.constant 0 : index
    %0 = vector.load %arg1[%c0, %c0_0, %c0_1] : memref<1x4x256xf32, #tpu.memory_space<vmem>>, vector<1x4x256xf32>
    %1 = vector.shape_cast %0 : vector<1x4x256xf32> to vector<4x256xf32>
    %c0_2 = arith.constant 0 : index
    %c0_3 = arith.constant 0 : index
    %2 = vector.load %arg2[%c0_2, %c0_3] : memref<4x1xf32, #tpu.memory_space<vmem>>, vector<4x1xf32>
    %3 = vector.broadcast %2 : vector<4x1xf32> to vector<4x256xf32>
    %4 = arith.mulf %1, %3 : vector<4x256xf32>
    %c0_4 = arith.constant 0 : index
    %c0_5 = arith.constant 0 : index
    %5 = vector.load %arg3[%c0_4, %c0_5] : memref<4x1xf32, #tpu.memory_space<vmem>>, vector<4x1xf32>
    %6 = vector.broadcast %5 : vector<4x1xf32> to vector<4x256xf32>
    %7 = arith.addf %4, %6 : vector<4x256xf32>
    %c0_6 = arith.constant 0 : index
    %c0_7 = arith.constant 0 : index
    %8 = vector.load %arg4[%c0_6, %c0_7] : memref<1x1xf32, #tpu.memory_space<vmem>>, vector<1x1xf32>
    %cst = arith.constant 0.000000e+00 : f32
    %9 = vector.broadcast %cst : f32 to vector<4x256xf32>
    %10 = arith.cmpf oge, %7, %9 : vector<4x256xf32>
    %11 = vector.broadcast %8 : vector<1x1xf32> to vector<4x256xf32>
    %12 = arith.mulf %11, %7 : vector<4x256xf32>
    %13 = arith.select %10, %7, %12 : vector<4x256xi1>, vector<4x256xf32>
    %c0_8 = arith.constant 0 : index
    %c0_9 = arith.constant 0 : index
    %14 = vector.load %arg5[%c0_8, %c0_9] : memref<8x4xf32, #tpu.memory_space<vmem>>, vector<8x4xf32>
    %cst_10 = arith.constant dense<0.000000e+00> : vector<8x256xf32>
    %15 = tpu.matmul %14, %13, %cst_10 {dimension_numbers = #tpu.dot_dimension_numbers<[1], [0], [0], [1], [0, 0, 1, 1], [], []>} : vector<8x4xf32>, vector<4x256xf32>, vector<8x256xf32> -> vector<8x256xf32>
    %c0_11 = arith.constant 0 : index
    %c0_12 = arith.constant 0 : index
    %c0_13 = arith.constant 0 : index
    %16 = vector.load %arg6[%c0_11, %c0_12, %c0_13] : memref<1x8x256xf32, #tpu.memory_space<vmem>>, vector<1x8x256xf32>
    %17 = vector.shape_cast %16 : vector<1x8x256xf32> to vector<8x256xf32>
    %18 = vector.shape_cast %15 : vector<8x256xf32> to vector<1x8x256xf32>
    tpu.vector_store %arg6[%c0_11, %c0_12, %c0_13], %18 {strides = array<i32>} : memref<1x8x256xf32, #tpu.memory_space<vmem>>, vector<1x8x256xf32>,
    %cst_14 = arith.constant dense<0.000000e+00> : vector<8xf32>
    %19 = vector.multi_reduction <add>, %15, %cst_14 [1] : vector<8x256xf32> to vector<8xf32>
    %20 = vector.shape_cast %19 : vector<8xf32> to vector<8x1xf32>
    %21 = arith.mulf %15, %15 : vector<8x256xf32>
    %cst_15 = arith.constant dense<0.000000e+00> : vector<8xf32>
    %22 = vector.multi_reduction <add>, %21, %cst_15 [1] : vector<8x256xf32> to vector<8xf32>
    %23 = vector.shape_cast %22 : vector<8xf32> to vector<8x1xf32>
    %24 = tpu.concatenate %20, %23 in 1 : vector<8x1xf32>, vector<8x1xf32> -> vector<8x2xf32>
    %c0_16 = arith.constant 0 : index
    %c0_17 = arith.constant 0 : index
    %c0_18 = arith.constant 0 : index
    %25 = vector.load %arg7[%c0_16, %c0_17, %c0_18] : memref<1x8x2xf32, #tpu.memory_space<vmem>>, vector<1x8x2xf32>
    %26 = vector.shape_cast %25 : vector<1x8x2xf32> to vector<8x2xf32>
    %27 = vector.shape_cast %24 : vector<8x2xf32> to vector<1x8x2xf32>
    tpu.vector_store %arg7[%c0_16, %c0_17, %c0_18], %27 {strides = array<i32>} : memref<1x8x2xf32, #tpu.memory_space<vmem>>, vector<1x8x2xf32>,
    return
  }
  func.func @transform_0(%arg0: i32) -> (i32, i32, i32) {
    %c0_i32 = arith.constant 0 : i32
    %c0_i32_0 = arith.constant 0 : i32
    %c0_i32_1 = arith.constant 0 : i32
    return %arg0, %c0_i32, %c0_i32_0 : i32, i32, i32
  }
  func.func @transform_1(%arg0: i32) -> (i32, i32) {
    %c0_i32 = arith.constant 0 : i32
    %c0_i32_0 = arith.constant 0 : i32
    %c0_i32_1 = arith.constant 0 : i32
    return %c0_i32, %c0_i32_0 : i32, i32
  }
  func.func @transform_2(%arg0: i32) -> (i32, i32) {
    %c0_i32 = arith.constant 0 : i32
    %c0_i32_0 = arith.constant 0 : i32
    %c0_i32_1 = arith.constant 0 : i32
    return %c0_i32, %c0_i32_0 : i32, i32
  }
  func.func @transform_3(%arg0: i32) -> (i32, i32) {
    %c0_i32 = arith.constant 0 : i32
    %c0_i32_0 = arith.constant 0 : i32
    %c0_i32_1 = arith.constant 0 : i32
    return %c0_i32, %c0_i32_0 : i32, i32
  }
  func.func @transform_4(%arg0: i32) -> (i32, i32) {
    %c0_i32 = arith.constant 0 : i32
    %c0_i32_0 = arith.constant 0 : i32
    %c0_i32_1 = arith.constant 0 : i32
    return %c0_i32, %c0_i32_0 : i32, i32
  }
  func.func @transform_5(%arg0: i32) -> (i32, i32, i32) {
    %c0_i32 = arith.constant 0 : i32
    %c0_i32_0 = arith.constant 0 : i32
    %c0_i32_1 = arith.constant 0 : i32
    return %arg0, %c0_i32, %c0_i32_0 : i32, i32, i32
  }
  func.func @transform_6(%arg0: i32) -> (i32, i32, i32) {
    %c0_i32 = arith.constant 0 : i32
    %c0_i32_0 = arith.constant 0 : i32
    %c0_i32_1 = arith.constant 0 : i32
    return %arg0, %c0_i32, %c0_i32_0 : i32, i32, i32
  }
}

module attributes {stable_mosaic.version = 11 : i64} {
  func.func @bn_act_conv3x3_kernel(%arg0: i32, %arg1: memref<1x4x256xf32, #tpu.memory_space<vmem>>, %arg2: memref<4x1xf32, #tpu.memory_space<vmem>>, %arg3: memref<4x1xf32, #tpu.memory_space<vmem>>, %arg4: memref<1x1xf32, #tpu.memory_space<vmem>>, %arg5: memref<4x36xf32, #tpu.memory_space<vmem>>, %arg6: memref<4x1xf32, #tpu.memory_space<vmem>>, %arg7: memref<9x256xf32, #tpu.memory_space<vmem>>, %arg8: memref<1x4x256xf32, #tpu.memory_space<vmem>>, %arg9: memref<1x4x2xf32, #tpu.memory_space<vmem>>) attributes {dimension_semantics = [#tpu.dimension_semantics<parallel>], iteration_bounds = array<i64: 2>, scalar_prefetch = 0 : i64, scratch_operands = 0 : i64, tpu.core_type = #tpu.core_type<tc>, window_params = [{transform_indices = @transform_0, window_bounds = array<i64: 1, 4, 256>}, {pipeline_mode = #tpu.pipeline_mode<synchronous>, transform_indices = @transform_1, window_bounds = array<i64: 4, 1>}, {pipeline_mode = #tpu.pipeline_mode<synchronous>, transform_indices = @transform_2, window_bounds = array<i64: 4, 1>}, {pipeline_mode = #tpu.pipeline_mode<synchronous>, transform_indices = @transform_3, window_bounds = array<i64: 1, 1>}, {pipeline_mode = #tpu.pipeline_mode<synchronous>, transform_indices = @transform_4, window_bounds = array<i64: 4, 36>}, {pipeline_mode = #tpu.pipeline_mode<synchronous>, transform_indices = @transform_5, window_bounds = array<i64: 4, 1>}, {pipeline_mode = #tpu.pipeline_mode<synchronous>, transform_indices = @transform_6, window_bounds = array<i64: 9, 256>}, {transform_indices = @transform_7, window_bounds = array<i64: 1, 4, 256>}, {transform_indices = @transform_8, window_bounds = array<i64: 1, 4, 2>}]} {
    %c0 = arith.constant 0 : index
    %c0_0 = arith.constant 0 : index
    %c0_1 = arith.constant 0 : index
    %0 = vector.load %arg1[%c0, %c0_0, %c0_1] : memref<1x4x256xf32, #tpu.memory_space<vmem>>, vector<1x4x256xf32>
    %1 = vector.shape_cast %0 : vector<1x4x256xf32> to vector<4x256xf32>
    %c0_2 = arith.constant 0 : index
    %c0_3 = arith.constant 0 : index
    %2 = vector.load %arg2[%c0_2, %c0_3] : memref<4x1xf32, #tpu.memory_space<vmem>>, vector<4x1xf32>
    %3 = vector.broadcast %2 : vector<4x1xf32> to vector<4x256xf32>
    %4 = arith.mulf %1, %3 : vector<4x256xf32>
    %c0_4 = arith.constant 0 : index
    %c0_5 = arith.constant 0 : index
    %5 = vector.load %arg3[%c0_4, %c0_5] : memref<4x1xf32, #tpu.memory_space<vmem>>, vector<4x1xf32>
    %6 = vector.broadcast %5 : vector<4x1xf32> to vector<4x256xf32>
    %7 = arith.addf %4, %6 : vector<4x256xf32>
    %c0_6 = arith.constant 0 : index
    %c0_7 = arith.constant 0 : index
    %8 = vector.load %arg4[%c0_6, %c0_7] : memref<1x1xf32, #tpu.memory_space<vmem>>, vector<1x1xf32>
    %cst = arith.constant 0.000000e+00 : f32
    %9 = vector.broadcast %cst : f32 to vector<4x256xf32>
    %10 = arith.cmpf oge, %7, %9 : vector<4x256xf32>
    %11 = vector.broadcast %8 : vector<1x1xf32> to vector<4x256xf32>
    %12 = arith.mulf %11, %7 : vector<4x256xf32>
    %13 = arith.select %10, %7, %12 : vector<4x256xi1>, vector<4x256xf32>
    %14 = vector.extract_strided_slice %13 {offsets = [0, 239], sizes = [4, 17], strides = [1, 1]} : vector<4x256xf32> to vector<4x17xf32>
    %15 = vector.extract_strided_slice %13 {offsets = [0, 0], sizes = [4, 239], strides = [1, 1]} : vector<4x256xf32> to vector<4x239xf32>
    %16 = tpu.concatenate %14, %15 in 1 : vector<4x17xf32>, vector<4x239xf32> -> vector<4x256xf32>
    %c0_8 = arith.constant 0 : index
    %c0_9 = arith.constant 0 : index
    %17 = vector.load %arg7[%c0_8, %c0_9] : memref<9x256xf32, #tpu.memory_space<vmem>>, vector<1x256xf32>
    %18 = vector.broadcast %17 : vector<1x256xf32> to vector<4x256xf32>
    %19 = arith.mulf %16, %18 : vector<4x256xf32>
    %20 = vector.extract_strided_slice %13 {offsets = [0, 240], sizes = [4, 16], strides = [1, 1]} : vector<4x256xf32> to vector<4x16xf32>
    %21 = vector.extract_strided_slice %13 {offsets = [0, 0], sizes = [4, 240], strides = [1, 1]} : vector<4x256xf32> to vector<4x240xf32>
    %22 = tpu.concatenate %20, %21 in 1 : vector<4x16xf32>, vector<4x240xf32> -> vector<4x256xf32>
    %c1 = arith.constant 1 : index
    %c0_10 = arith.constant 0 : index
    %23 = vector.load %arg7[%c1, %c0_10] : memref<9x256xf32, #tpu.memory_space<vmem>>, vector<1x256xf32>
    %24 = vector.broadcast %23 : vector<1x256xf32> to vector<4x256xf32>
    %25 = arith.mulf %22, %24 : vector<4x256xf32>
    %26 = vector.extract_strided_slice %13 {offsets = [0, 241], sizes = [4, 15], strides = [1, 1]} : vector<4x256xf32> to vector<4x15xf32>
    %27 = vector.extract_strided_slice %13 {offsets = [0, 0], sizes = [4, 241], strides = [1, 1]} : vector<4x256xf32> to vector<4x241xf32>
    %28 = tpu.concatenate %26, %27 in 1 : vector<4x15xf32>, vector<4x241xf32> -> vector<4x256xf32>
    %c2 = arith.constant 2 : index
    %c0_11 = arith.constant 0 : index
    %29 = vector.load %arg7[%c2, %c0_11] : memref<9x256xf32, #tpu.memory_space<vmem>>, vector<1x256xf32>
    %30 = vector.broadcast %29 : vector<1x256xf32> to vector<4x256xf32>
    %31 = arith.mulf %28, %30 : vector<4x256xf32>
    %32 = vector.extract_strided_slice %13 {offsets = [0, 255], sizes = [4, 1], strides = [1, 1]} : vector<4x256xf32> to vector<4x1xf32>
    %33 = vector.extract_strided_slice %13 {offsets = [0, 0], sizes = [4, 255], strides = [1, 1]} : vector<4x256xf32> to vector<4x255xf32>
    %34 = tpu.concatenate %32, %33 in 1 : vector<4x1xf32>, vector<4x255xf32> -> vector<4x256xf32>
    %c3 = arith.constant 3 : index
    %c0_12 = arith.constant 0 : index
    %35 = vector.load %arg7[%c3, %c0_12] : memref<9x256xf32, #tpu.memory_space<vmem>>, vector<1x256xf32>
    %36 = vector.broadcast %35 : vector<1x256xf32> to vector<4x256xf32>
    %37 = arith.mulf %34, %36 : vector<4x256xf32>
    %38 = vector.extract_strided_slice %13 {offsets = [0, 1], sizes = [4, 255], strides = [1, 1]} : vector<4x256xf32> to vector<4x255xf32>
    %39 = vector.extract_strided_slice %13 {offsets = [0, 0], sizes = [4, 1], strides = [1, 1]} : vector<4x256xf32> to vector<4x1xf32>
    %40 = tpu.concatenate %38, %39 in 1 : vector<4x255xf32>, vector<4x1xf32> -> vector<4x256xf32>
    %c5 = arith.constant 5 : index
    %c0_13 = arith.constant 0 : index
    %41 = vector.load %arg7[%c5, %c0_13] : memref<9x256xf32, #tpu.memory_space<vmem>>, vector<1x256xf32>
    %42 = vector.broadcast %41 : vector<1x256xf32> to vector<4x256xf32>
    %43 = arith.mulf %40, %42 : vector<4x256xf32>
    %44 = vector.extract_strided_slice %13 {offsets = [0, 15], sizes = [4, 241], strides = [1, 1]} : vector<4x256xf32> to vector<4x241xf32>
    %45 = vector.extract_strided_slice %13 {offsets = [0, 0], sizes = [4, 15], strides = [1, 1]} : vector<4x256xf32> to vector<4x15xf32>
    %46 = tpu.concatenate %44, %45 in 1 : vector<4x241xf32>, vector<4x15xf32> -> vector<4x256xf32>
    %c6 = arith.constant 6 : index
    %c0_14 = arith.constant 0 : index
    %47 = vector.load %arg7[%c6, %c0_14] : memref<9x256xf32, #tpu.memory_space<vmem>>, vector<1x256xf32>
    %48 = vector.broadcast %47 : vector<1x256xf32> to vector<4x256xf32>
    %49 = arith.mulf %46, %48 : vector<4x256xf32>
    %50 = vector.extract_strided_slice %13 {offsets = [0, 16], sizes = [4, 240], strides = [1, 1]} : vector<4x256xf32> to vector<4x240xf32>
    %51 = vector.extract_strided_slice %13 {offsets = [0, 0], sizes = [4, 16], strides = [1, 1]} : vector<4x256xf32> to vector<4x16xf32>
    %52 = tpu.concatenate %50, %51 in 1 : vector<4x240xf32>, vector<4x16xf32> -> vector<4x256xf32>
    %c7 = arith.constant 7 : index
    %c0_15 = arith.constant 0 : index
    %53 = vector.load %arg7[%c7, %c0_15] : memref<9x256xf32, #tpu.memory_space<vmem>>, vector<1x256xf32>
    %54 = vector.broadcast %53 : vector<1x256xf32> to vector<4x256xf32>
    %55 = arith.mulf %52, %54 : vector<4x256xf32>
    %56 = vector.extract_strided_slice %13 {offsets = [0, 17], sizes = [4, 239], strides = [1, 1]} : vector<4x256xf32> to vector<4x239xf32>
    %57 = vector.extract_strided_slice %13 {offsets = [0, 0], sizes = [4, 17], strides = [1, 1]} : vector<4x256xf32> to vector<4x17xf32>
    %58 = tpu.concatenate %56, %57 in 1 : vector<4x239xf32>, vector<4x17xf32> -> vector<4x256xf32>
    %c8 = arith.constant 8 : index
    %c0_16 = arith.constant 0 : index
    %59 = vector.load %arg7[%c8, %c0_16] : memref<9x256xf32, #tpu.memory_space<vmem>>, vector<1x256xf32>
    %60 = vector.broadcast %59 : vector<1x256xf32> to vector<4x256xf32>
    %61 = arith.mulf %58, %60 : vector<4x256xf32>
    %62 = tpu.concatenate %19, %25, %31, %37, %13, %43, %49, %55, %61 in 0 : vector<4x256xf32>, vector<4x256xf32>, vector<4x256xf32>, vector<4x256xf32>, vector<4x256xf32>, vector<4x256xf32>, vector<4x256xf32>, vector<4x256xf32>, vector<4x256xf32> -> vector<36x256xf32>
    %c0_17 = arith.constant 0 : index
    %c0_18 = arith.constant 0 : index
    %63 = vector.load %arg5[%c0_17, %c0_18] : memref<4x36xf32, #tpu.memory_space<vmem>>, vector<4x36xf32>
    %cst_19 = arith.constant dense<0.000000e+00> : vector<4x256xf32>
    %64 = tpu.matmul %63, %62, %cst_19 {dimension_numbers = #tpu.dot_dimension_numbers<[1], [0], [0], [1], [0, 0, 1, 1], [], []>} : vector<4x36xf32>, vector<36x256xf32>, vector<4x256xf32> -> vector<4x256xf32>
    %c0_20 = arith.constant 0 : index
    %c0_21 = arith.constant 0 : index
    %65 = vector.load %arg6[%c0_20, %c0_21] : memref<4x1xf32, #tpu.memory_space<vmem>>, vector<4x1xf32>
    %66 = vector.broadcast %65 : vector<4x1xf32> to vector<4x256xf32>
    %67 = arith.addf %64, %66 : vector<4x256xf32>
    %c0_22 = arith.constant 0 : index
    %c0_23 = arith.constant 0 : index
    %c0_24 = arith.constant 0 : index
    %68 = vector.load %arg8[%c0_22, %c0_23, %c0_24] : memref<1x4x256xf32, #tpu.memory_space<vmem>>, vector<1x4x256xf32>
    %69 = vector.shape_cast %68 : vector<1x4x256xf32> to vector<4x256xf32>
    %70 = vector.shape_cast %67 : vector<4x256xf32> to vector<1x4x256xf32>
    tpu.vector_store %arg8[%c0_22, %c0_23, %c0_24], %70 {strides = array<i32>} : memref<1x4x256xf32, #tpu.memory_space<vmem>>, vector<1x4x256xf32>,
    %cst_25 = arith.constant dense<0.000000e+00> : vector<4xf32>
    %71 = vector.multi_reduction <add>, %67, %cst_25 [1] : vector<4x256xf32> to vector<4xf32>
    %72 = vector.shape_cast %71 : vector<4xf32> to vector<4x1xf32>
    %73 = arith.mulf %67, %67 : vector<4x256xf32>
    %cst_26 = arith.constant dense<0.000000e+00> : vector<4xf32>
    %74 = vector.multi_reduction <add>, %73, %cst_26 [1] : vector<4x256xf32> to vector<4xf32>
    %75 = vector.shape_cast %74 : vector<4xf32> to vector<4x1xf32>
    %76 = tpu.concatenate %72, %75 in 1 : vector<4x1xf32>, vector<4x1xf32> -> vector<4x2xf32>
    %c0_27 = arith.constant 0 : index
    %c0_28 = arith.constant 0 : index
    %c0_29 = arith.constant 0 : index
    %77 = vector.load %arg9[%c0_27, %c0_28, %c0_29] : memref<1x4x2xf32, #tpu.memory_space<vmem>>, vector<1x4x2xf32>
    %78 = vector.shape_cast %77 : vector<1x4x2xf32> to vector<4x2xf32>
    %79 = vector.shape_cast %76 : vector<4x2xf32> to vector<1x4x2xf32>
    tpu.vector_store %arg9[%c0_27, %c0_28, %c0_29], %79 {strides = array<i32>} : memref<1x4x2xf32, #tpu.memory_space<vmem>>, vector<1x4x2xf32>,
    return
  }
  func.func @transform_0(%arg0: i32) -> (i32, i32, i32) {
    %c0_i32 = arith.constant 0 : i32
    %c0_i32_0 = arith.constant 0 : i32
    %c0_i32_1 = arith.constant 0 : i32
    return %arg0, %c0_i32, %c0_i32_0 : i32, i32, i32
  }
  func.func @transform_1(%arg0: i32) -> (i32, i32) {
    %c0_i32 = arith.constant 0 : i32
    %c0_i32_0 = arith.constant 0 : i32
    %c0_i32_1 = arith.constant 0 : i32
    return %c0_i32, %c0_i32_0 : i32, i32
  }
  func.func @transform_2(%arg0: i32) -> (i32, i32) {
    %c0_i32 = arith.constant 0 : i32
    %c0_i32_0 = arith.constant 0 : i32
    %c0_i32_1 = arith.constant 0 : i32
    return %c0_i32, %c0_i32_0 : i32, i32
  }
  func.func @transform_3(%arg0: i32) -> (i32, i32) {
    %c0_i32 = arith.constant 0 : i32
    %c0_i32_0 = arith.constant 0 : i32
    %c0_i32_1 = arith.constant 0 : i32
    return %c0_i32, %c0_i32_0 : i32, i32
  }
  func.func @transform_4(%arg0: i32) -> (i32, i32) {
    %c0_i32 = arith.constant 0 : i32
    %c0_i32_0 = arith.constant 0 : i32
    %c0_i32_1 = arith.constant 0 : i32
    return %c0_i32, %c0_i32_0 : i32, i32
  }
  func.func @transform_5(%arg0: i32) -> (i32, i32) {
    %c0_i32 = arith.constant 0 : i32
    %c0_i32_0 = arith.constant 0 : i32
    %c0_i32_1 = arith.constant 0 : i32
    return %c0_i32, %c0_i32_0 : i32, i32
  }
  func.func @transform_6(%arg0: i32) -> (i32, i32) {
    %c0_i32 = arith.constant 0 : i32
    %c0_i32_0 = arith.constant 0 : i32
    %c0_i32_1 = arith.constant 0 : i32
    return %c0_i32, %c0_i32_0 : i32, i32
  }
  func.func @transform_7(%arg0: i32) -> (i32, i32, i32) {
    %c0_i32 = arith.constant 0 : i32
    %c0_i32_0 = arith.constant 0 : i32
    %c0_i32_1 = arith.constant 0 : i32
    return %arg0, %c0_i32, %c0_i32_0 : i32, i32, i32
  }
  func.func @transform_8(%arg0: i32) -> (i32, i32, i32) {
    %c0_i32 = arith.constant 0 : i32
    %c0_i32_0 = arith.constant 0 : i32
    %c0_i32_1 = arith.constant 0 : i32
    return %arg0, %c0_i32, %c0_i32_0 : i32, i32, i32
  }
}

module attributes {stable_mosaic.version = 11 : i64} {
  func.func @bn_add_prelu_kernel(%arg0: i32, %arg1: memref<1x8x256xf32, #tpu.memory_space<vmem>>, %arg2: memref<8x1xf32, #tpu.memory_space<vmem>>, %arg3: memref<8x1xf32, #tpu.memory_space<vmem>>, %arg4: memref<1x4x256xf32, #tpu.memory_space<vmem>>, %arg5: memref<1x1xf32, #tpu.memory_space<vmem>>, %arg6: memref<1x8x256xf32, #tpu.memory_space<vmem>>) attributes {dimension_semantics = [#tpu.dimension_semantics<parallel>], iteration_bounds = array<i64: 2>, scalar_prefetch = 0 : i64, scratch_operands = 0 : i64, tpu.core_type = #tpu.core_type<tc>, window_params = [{transform_indices = @transform_0, window_bounds = array<i64: 1, 8, 256>}, {pipeline_mode = #tpu.pipeline_mode<synchronous>, transform_indices = @transform_1, window_bounds = array<i64: 8, 1>}, {pipeline_mode = #tpu.pipeline_mode<synchronous>, transform_indices = @transform_2, window_bounds = array<i64: 8, 1>}, {transform_indices = @transform_3, window_bounds = array<i64: 1, 4, 256>}, {pipeline_mode = #tpu.pipeline_mode<synchronous>, transform_indices = @transform_4, window_bounds = array<i64: 1, 1>}, {transform_indices = @transform_5, window_bounds = array<i64: 1, 8, 256>}]} {
    %c0 = arith.constant 0 : index
    %c0_0 = arith.constant 0 : index
    %c0_1 = arith.constant 0 : index
    %0 = vector.load %arg1[%c0, %c0_0, %c0_1] : memref<1x8x256xf32, #tpu.memory_space<vmem>>, vector<1x8x256xf32>
    %1 = vector.shape_cast %0 : vector<1x8x256xf32> to vector<8x256xf32>
    %c0_2 = arith.constant 0 : index
    %c0_3 = arith.constant 0 : index
    %2 = vector.load %arg2[%c0_2, %c0_3] : memref<8x1xf32, #tpu.memory_space<vmem>>, vector<8x1xf32>
    %3 = vector.broadcast %2 : vector<8x1xf32> to vector<8x256xf32>
    %4 = arith.mulf %1, %3 : vector<8x256xf32>
    %c0_4 = arith.constant 0 : index
    %c0_5 = arith.constant 0 : index
    %5 = vector.load %arg3[%c0_4, %c0_5] : memref<8x1xf32, #tpu.memory_space<vmem>>, vector<8x1xf32>
    %6 = vector.broadcast %5 : vector<8x1xf32> to vector<8x256xf32>
    %7 = arith.addf %4, %6 : vector<8x256xf32>
    %c0_6 = arith.constant 0 : index
    %c0_7 = arith.constant 0 : index
    %c0_8 = arith.constant 0 : index
    %8 = vector.load %arg4[%c0_6, %c0_7, %c0_8] : memref<1x4x256xf32, #tpu.memory_space<vmem>>, vector<1x4x256xf32>
    %9 = vector.shape_cast %8 : vector<1x4x256xf32> to vector<4x256xf32>
    %10 = tpu.concatenate %9, %9 in 0 : vector<4x256xf32>, vector<4x256xf32> -> vector<8x256xf32>
    %11 = arith.addf %7, %10 : vector<8x256xf32>
    %c0_9 = arith.constant 0 : index
    %c0_10 = arith.constant 0 : index
    %12 = vector.load %arg5[%c0_9, %c0_10] : memref<1x1xf32, #tpu.memory_space<vmem>>, vector<1x1xf32>
    %cst = arith.constant 0.000000e+00 : f32
    %13 = vector.broadcast %cst : f32 to vector<8x256xf32>
    %14 = arith.cmpf oge, %11, %13 : vector<8x256xf32>
    %15 = vector.broadcast %12 : vector<1x1xf32> to vector<8x256xf32>
    %16 = arith.mulf %15, %11 : vector<8x256xf32>
    %17 = arith.select %14, %11, %16 : vector<8x256xi1>, vector<8x256xf32>
    %c0_11 = arith.constant 0 : index
    %c0_12 = arith.constant 0 : index
    %c0_13 = arith.constant 0 : index
    %18 = vector.load %arg6[%c0_11, %c0_12, %c0_13] : memref<1x8x256xf32, #tpu.memory_space<vmem>>, vector<1x8x256xf32>
    %19 = vector.shape_cast %18 : vector<1x8x256xf32> to vector<8x256xf32>
    %20 = vector.shape_cast %17 : vector<8x256xf32> to vector<1x8x256xf32>
    tpu.vector_store %arg6[%c0_11, %c0_12, %c0_13], %20 {strides = array<i32>} : memref<1x8x256xf32, #tpu.memory_space<vmem>>, vector<1x8x256xf32>,
    return
  }
  func.func @transform_0(%arg0: i32) -> (i32, i32, i32) {
    %c0_i32 = arith.constant 0 : i32
    %c0_i32_0 = arith.constant 0 : i32
    %c0_i32_1 = arith.constant 0 : i32
    return %arg0, %c0_i32, %c0_i32_0 : i32, i32, i32
  }
  func.func @transform_1(%arg0: i32) -> (i32, i32) {
    %c0_i32 = arith.constant 0 : i32
    %c0_i32_0 = arith.constant 0 : i32
    %c0_i32_1 = arith.constant 0 : i32
    return %c0_i32, %c0_i32_0 : i32, i32
  }
  func.func @transform_2(%arg0: i32) -> (i32, i32) {
    %c0_i32 = arith.constant 0 : i32
    %c0_i32_0 = arith.constant 0 : i32
    %c0_i32_1 = arith.constant 0 : i32
    return %c0_i32, %c0_i32_0 : i32, i32
  }
  func.func @transform_3(%arg0: i32) -> (i32, i32, i32) {
    %c0_i32 = arith.constant 0 : i32
    %c0_i32_0 = arith.constant 0 : i32
    %c0_i32_1 = arith.constant 0 : i32
    return %arg0, %c0_i32, %c0_i32_0 : i32, i32, i32
  }
  func.func @transform_4(%arg0: i32) -> (i32, i32) {
    %c0_i32 = arith.constant 0 : i32
    %c0_i32_0 = arith.constant 0 : i32
    %c0_i32_1 = arith.constant 0 : i32
    return %c0_i32, %c0_i32_0 : i32, i32
  }
  func.func @transform_5(%arg0: i32) -> (i32, i32, i32) {
    %c0_i32 = arith.constant 0 : i32
    %c0_i32_0 = arith.constant 0 : i32
    %c0_i32_1 = arith.constant 0 : i32
    return %arg0, %c0_i32, %c0_i32_0 : i32, i32, i32
  }
}

</mosaic_0001>

<llo_original>
// kernel: _lambda_.6
$region0: #{_lambda_.6}
  #allocation0 [shape = 'u32[]', space=smem, size = 0x4, offset = 0x4, fixed_abs, tag = 'smem constant byte address 0x4 - core index']
  #allocation1 [shape = 'u32[144,128]{1,0:T(1,128)}', space=vmem, size = 0x12000, scoped, tag = 'internal scratch']
  #allocation2 [shape = 'f32[1,1]{1,0:T(1,128)S(1)}', space=vmem, size = 0x200, scoped, tag = 'scoped memory for _lambda_.6']
  %s0 = inlined_call_operand.vmem [shape: f32[2,4,256], index: 0, kind: input, shape index: {}]
  %s1 = inlined_call_operand.vmem [shape: f32[4,1], index: 1, kind: input, shape index: {}]
  %s2 = inlined_call_operand.vmem [shape: f32[4,1], index: 2, kind: input, shape index: {}]
  %s3 = inlined_call_operand.<no memory space> [shape: f32[1,1], index: 3, kind: input, shape index: {}]
  %s4 = inlined_call_operand.vmem [shape: f32[8,4], index: 4, kind: input, shape index: {}]
  %s5 = inlined_call_operand.vmem [shape: f32[2,8,256], index: 5, kind: output, shape index: {0}]
  %s6 = inlined_call_operand.vmem [shape: f32[2,8,2], index: 6, kind: output, shape index: {1}]
  %7 = xla_tuple %s5, %s6
  %s8 = sld [smem:[#allocation0]]
  $region61: #{_lambda_.6} parent=0
    _
  %s10 = ssub.s32 1, %s8
  %s11 = scalar_select 0, %s10, %s8
  %v12 = vstv %s3
  %13 = vst [vmem:[#allocation2] sm:$0x1] %v12
  loop: start=0, step=1, limit=4
  $region2: #{_lambda_.6} parent=0 // loop_pre_header
    _
  $region3: #{_lambda_.6} parent=0 // loop_header
    %s15 = sphi 0, %s19
    %p16 = scmp.ge.s32.totalorder %s15, 4
    %s25 = sphi 0, %s27
    %s28 = sphi 0, %s25
    %s29 = sphi 0, %s28
    %s45 = sphi 0, %s29
    %s49 = sphi 0, %s49
    %s51 = sphi 0, %s49
    %s52 = sphi 0, %s51
    %s66 = sphi 0, %s52
    %s70 = sphi 0, %s70
    %s72 = sphi 0, %s70
    %s73 = sphi 0, %s72
    %s87 = sphi 0, %s73
    %s91 = sphi 0, %s91
    %s93 = sphi 0, %s91
    %s94 = sphi 0, %s93
    %s108 = sphi 0, %s94
    %s112 = sphi 0, %s112
    %s114 = sphi 0, %s112
    %s115 = sphi 0, %s114
    %s129 = sphi 0, %s115
    %s135 = sphi 0, %s137
    %s138 = sphi 0, %s135
    %s139 = sphi 0, %s138
    %s155 = sphi 0, %s139
    %s161 = sphi 0, %s163
    %s164 = sphi 0, %s161
    %s165 = sphi 0, %s164
    %s181 = sphi 0, %s165
  $region4: #{_lambda_.6} parent=0 // loop_header_branch
    %18 = sbr.rel (%p16) target = $region8
  $region5: #{_lambda_.6} parent=0 // loop_body
    %s20 = ssub.s32 %s15, 1
    %s21 = ssub.s32 %s15, 2
    %s22 = sadd.s32 %s15, 1
    %s23 = ssub.s32 %s15, %s22
    %p24 = scmp.eq.s32.totalorder %s23, 0
    %s26 = sadd.s32 %s25, 1
    %s27 = scalar_select %p24, %s25, %s26
    %p30 = pneg %p24
    %p31 = scmp.eq.s32.totalorder %s15, 1
    %p32 = por %p30, %p31
    %p33 = scmp.ne.s32.totalorder %s25, %s28
    %p34 = scmp.eq.s32.totalorder %s15, 0
    %p35 = por %p33, %p34
    %p36 = scmp.ne.s32.totalorder %s25, %s28
    %p37 = scmp.eq.s32.totalorder %s20, 1
    %p38 = por %p36, %p37
    %p39 = scmp.ne.s32.totalorder %s28, %s29
    %p40 = scmp.eq.s32.totalorder %s20, 0
    %p41 = por %p39, %p40
    %p42 = scmp.ne.s32.totalorder %s28, %s29
    %p43 = scmp.eq.s32.totalorder %s21, 1
    %p44 = por %p42, %p43
    %p46 = scmp.ne.s32.totalorder %s29, %s45
    %p47 = scmp.eq.s32.totalorder %s21, 0
    %p48 = por %p46, %p47
    %s50 = sadd.s32 %s49, 1
    %p53 = scmp.eq.s32.totalorder %s15, 1
    %p54 = scmp.ne.s32.totalorder %s49, %s51
    %p55 = scmp.eq.s32.totalorder %s15, 0
    %p56 = por %p54, %p55
    %p57 = scmp.ne.s32.totalorder %s49, %s51
    %p58 = scmp.eq.s32.totalorder %s20, 1
    %p59 = por %p57, %p58
    %p60 = scmp.ne.s32.totalorder %s51, %s52
    %p61 = scmp.eq.s32.totalorder %s20, 0
    %p62 = por %p60, %p61
    %p63 = scmp.ne.s32.totalorder %s51, %s52
    %p64 = scmp.eq.s32.totalorder %s21, 1
    %p65 = por %p63, %p64
    %p67 = scmp.ne.s32.totalorder %s52, %s66
    %p68 = scmp.eq.s32.totalorder %s21, 0
    %p69 = por %p67, %p68
    %s71 = sadd.s32 %s70, 1
    %p74 = scmp.eq.s32.totalorder %s15, 1
    %p75 = scmp.ne.s32.totalorder %s70, %s72
    %p76 = scmp.eq.s32.totalorder %s15, 0
    %p77 = por %p75, %p76
    %p78 = scmp.ne.s32.totalorder %s70, %s72
    %p79 = scmp.eq.s32.totalorder %s20, 1
    %p80 = por %p78, %p79
    %p81 = scmp.ne.s32.totalorder %s72, %s73
    %p82 = scmp.eq.s32.totalorder %s20, 0
    %p83 = por %p81, %p82
    %p84 = scmp.ne.s32.totalorder %s72, %s73
    %p85 = scmp.eq.s32.totalorder %s21, 1
    %p86 = por %p84, %p85
    %p88 = scmp.ne.s32.totalorder %s73, %s87
    %p89 = scmp.eq.s32.totalorder %s21, 0
    %p90 = por %p88, %p89
    %s92 = sadd.s32 %s91, 1
    %p95 = scmp.eq.s32.totalorder %s15, 1
    %p96 = scmp.ne.s32.totalorder %s91, %s93
    %p97 = scmp.eq.s32.totalorder %s15, 0
    %p98 = por %p96, %p97
    %p99 = scmp.ne.s32.totalorder %s91, %s93
    %p100 = scmp.eq.s32.totalorder %s20, 1
    %p101 = por %p99, %p100
    %p102 = scmp.ne.s32.totalorder %s93, %s94
    %p103 = scmp.eq.s32.totalorder %s20, 0
    %p104 = por %p102, %p103
    %p105 = scmp.ne.s32.totalorder %s93, %s94
    %p106 = scmp.eq.s32.totalorder %s21, 1
    %p107 = por %p105, %p106
    %p109 = scmp.ne.s32.totalorder %s94, %s108
    %p110 = scmp.eq.s32.totalorder %s21, 0
    %p111 = por %p109, %p110
    %s113 = sadd.s32 %s112, 1
    %p116 = scmp.eq.s32.totalorder %s15, 1
    %p117 = scmp.ne.s32.totalorder %s112, %s114
    %p118 = scmp.eq.s32.totalorder %s15, 0
    %p119 = por %p117, %p118
    %p120 = scmp.ne.s32.totalorder %s112, %s114
    %p121 = scmp.eq.s32.totalorder %s20, 1
    %p122 = por %p120, %p121
    %p123 = scmp.ne.s32.totalorder %s114, %s115
    %p124 = scmp.eq.s32.totalorder %s20, 0
    %p125 = por %p123, %p124
    %p126 = scmp.ne.s32.totalorder %s114, %s115
    %p127 = scmp.eq.s32.totalorder %s21, 1
    %p128 = por %p126, %p127
    %p130 = scmp.ne.s32.totalorder %s115, %s129
    %p131 = scmp.eq.s32.totalorder %s21, 0
    %p132 = por %p130, %p131
    %s133 = ssub.s32 %s15, %s22
    %p134 = scmp.eq.s32.totalorder %s133, 0
    %s136 = sadd.s32 %s135, 1
    %s137 = scalar_select %p134, %s135, %s136
    %p140 = pneg %p134
    %p141 = scmp.eq.s32.totalorder %s15, 1
    %p142 = por %p140, %p141
    %p143 = scmp.ne.s32.totalorder %s135, %s138
    %p144 = scmp.eq.s32.totalorder %s15, 0
    %p145 = por %p143, %p144
    %p146 = scmp.ne.s32.totalorder %s135, %s138
    %p147 = scmp.eq.s32.totalorder %s20, 1
    %p148 = por %p146, %p147
    %p149 = scmp.ne.s32.totalorder %s138, %s139
    %p150 = scmp.eq.s32.totalorder %s20, 0
    %p151 = por %p149, %p150
    %p152 = scmp.ne.s32.totalorder %s138, %s139
    %p153 = scmp.eq.s32.totalorder %s21, 1
    %p154 = por %p152, %p153
    %p156 = scmp.ne.s32.totalorder %s139, %s155
    %p157 = scmp.eq.s32.totalorder %s21, 0
    %p158 = por %p156, %p157
    %s159 = ssub.s32 %s15, %s22
    %p160 = scmp.eq.s32.totalorder %s159, 0
    %s162 = sadd.s32 %s161, 1
    %s163 = scalar_select %p160, %s161, %s162
    %p166 = pneg %p160
    %p167 = scmp.eq.s32.totalorder %s15, 1
    %p168 = por %p166, %p167
    %p169 = scmp.ne.s32.totalorder %s161, %s164
    %p170 = scmp.eq.s32.totalorder %s15, 0
    %p171 = por %p169, %p170
    %p172 = scmp.ne.s32.totalorder %s161, %s164
    %p173 = scmp.eq.s32.totalorder %s20, 1
    %p174 = por %p172, %p173
    %p175 = scmp.ne.s32.totalorder %s164, %s165
    %p176 = scmp.eq.s32.totalorder %s20, 0
    %p177 = por %p175, %p176
    %p178 = scmp.ne.s32.totalorder %s164, %s165
    %p179 = scmp.eq.s32.totalorder %s21, 1
    %p180 = por %p178, %p179
    %p182 = scmp.ne.s32.totalorder %s165, %s181
    %p183 = scmp.eq.s32.totalorder %s21, 0
    %p184 = por %p182, %p183
    %p185 = scmp.le.s32.totalorder 1, %s15
    %p186 = scmp.lt.s32.totalorder %s15, 3
    %p187 = pnand %p185, %p186
    %p188 = pneg %p187
    // Predicated region
    $region9: #{_lambda_.6} parent=5 // pred_check
      _
    $region10: #{_lambda_.6} parent=5 // pred_check_branch
      %190 = sbr.rel (%p187) target = $region12
    $region11: #{_lambda_.6} parent=5 // pred_region
      %s191 = ssub.s32 %s15, 1
      // Predicated region
      $region13: #{_lambda_.6} parent=11 // pred_check
        %p192 = pneg %p62
      $region14: #{_lambda_.6} parent=11 // pred_check_branch
        %194 = sbr.rel (%p192) target = $region16
      $region15: #{_lambda_.6} parent=11 // pred_region
        _
      $region16: #{_lambda_.6} parent=11 // pred_fallthru
        _
      // Predicated region
      $region17: #{_lambda_.6} parent=11 // pred_check
        %p195 = pneg %p83
      $region18: #{_lambda_.6} parent=11 // pred_check_branch
        %197 = sbr.rel (%p195) target = $region20
      $region19: #{_lambda_.6} parent=11 // pred_region
        _
      $region20: #{_lambda_.6} parent=11 // pred_fallthru
        _
      // Predicated region
      $region21: #{_lambda_.6} parent=11 // pred_check
        %p198 = pneg %p104
      $region22: #{_lambda_.6} parent=11 // pred_check_branch
        %200 = sbr.rel (%p198) target = $region24
      $region23: #{_lambda_.6} parent=11 // pred_region
        _
      $region24: #{_lambda_.6} parent=11 // pred_fallthru
        _
      // Predicated region
      $region25: #{_lambda_.6} parent=11 // pred_check
        %p201 = pneg %p125
      $region26: #{_lambda_.6} parent=11 // pred_check_branch
        %203 = sbr.rel (%p201) target = $region28
      $region27: #{_lambda_.6} parent=11 // pred_region
        _
      $region28: #{_lambda_.6} parent=11 // pred_fallthru
        _
    $region12: #{_lambda_.6} parent=5 // pred_fallthru
      _
    %p204 = scmp.lt.s32.totalorder %s15, 2
    // Predicated region
    $region29: #{_lambda_.6} parent=5 // pred_check
      %p205 = pneg %p204
    $region30: #{_lambda_.6} parent=5 // pred_check_branch
      %207 = sbr.rel (%p205) target = $region32
    $region31: #{_lambda_.6} parent=5 // pred_region
      // Predicated region
      $region33: #{_lambda_.6} parent=31 // pred_check
        %p208 = pneg %p35
      $region34: #{_lambda_.6} parent=31 // pred_check_branch
        %210 = sbr.rel (%p208) target = $region36
      $region35: #{_lambda_.6} parent=31 // pred_region
        %p211 = scmp.lt.s32.totalorder %s15, 1
        %s212 = scalar_select %p211, %s15, 1
        %s213 = smul.addr %s212, 2
        %s214 = smul.addr %s213, 4
        %s215 = scalar_lea.vmem %s0, %s214
      $region36: #{_lambda_.6} parent=31 // pred_fallthru
        _
    $region32: #{_lambda_.6} parent=5 // pred_fallthru
      _
    %p216 = scmp.le.s32.totalorder 1, %s15
    %p217 = scmp.lt.s32.totalorder %s15, 3
    %p218 = pnand %p216, %p217
    %p219 = pneg %p218
    // Predicated region
    $region37: #{_lambda_.6} parent=5 // pred_check
      _
    $region38: #{_lambda_.6} parent=5 // pred_check_branch
      %221 = sbr.rel (%p218) target = $region40
    $region39: #{_lambda_.6} parent=5 // pred_region
      %s222 = ssub.s32 %s15, 1
      %p223 = scmp.lt.s32.totalorder %s20, 1
      %s224 = scalar_select %p223, %s20, 1
      %s225 = smul.addr %s224, 2
      %s226 = smul.addr %s225, 4
      %s227 = scalar_lea.vmem %s0, %s226
      %p228 = pneg %p41
      %p229 = pneg %p38
      %p230 = pneg %p62
      %p231 = pneg %p59
      %p232 = pneg %p83
      %p233 = pneg %p80
      %p234 = pneg %p104
      %p235 = pneg %p101
      %p236 = pneg %p125
      %p237 = pneg %p122
      %p238 = pneg %p151
      %p239 = pneg %p148
      %p240 = scmp.lt.s32.totalorder %s20, 1
      %s241 = scalar_select %p240, %s20, 1
      %s242 = smul.addr %s241, 2
      %s243 = smul.addr %s242, 8
      %s244 = scalar_lea.vmem %s5, %s243
      %p245 = pneg %p177
      %p246 = pneg %p174
      %p247 = scmp.lt.s32.totalorder %s20, 1
      %s248 = scalar_select %p247, %s20, 1
      %s249 = smul.addr %s248, 8
      %s250 = scalar_lea.vmem %s6, %s249
      %p251 = scmp.lt.s32.totalorder %s20, 1
      %s252 = scalar_select %p251, %s20, 1
      %s253 = smul.addr %s252, 2
      %s254 = smul.addr %s253, 4
      %s255 = scalar_lea.vmem %s0, %s254
      %p256 = scmp.lt.s32.totalorder %s20, 1
      %s257 = scalar_select %p256, %s20, 1
      %s258 = smul.addr %s257, 2
      %s259 = smul.addr %s258, 8
      %s260 = scalar_lea.vmem %s5, %s259
      %p261 = scmp.lt.s32.totalorder %s20, 1
      %s262 = scalar_select %p261, %s20, 1
      %s263 = smul.addr %s262, 8
      %s264 = scalar_lea.vmem %s6, %s263
      %v265 = vld [vmem:[%s255] sm:$0xff]
      %v266 = vld [vmem:[%s1] sm:$0xf]
      %268 = vset.pattern.permute.xlu0 0
      %269 = vperm.xlu0 %268, %v266
      %v270 = vpop.permute.xlu0 %269
      %v272 = vunpack.c.l.s4 839922192
      %v273 = vunpack.c.0.s8 %v272
      %v274 = vlaneseq
      %v275 = vshrl.u32 %v274, 7
      %v276 = vsub.s32 %v273, %v275
      %v277 = vrot.slane %v270, %v276
      %v279 = vmul.f32 %v265, %v277
      %v280 = vld [vmem:[%s2] sm:$0xf]
      %282 = vset.pattern.permute.xlu0 0
      %283 = vperm.xlu0 %282, %v280
      %v284 = vpop.permute.xlu0 %283
      %v286 = vunpack.c.l.s4 839922192
      %v287 = vunpack.c.0.s8 %v286
      %v288 = vlaneseq
      %v289 = vshrl.u32 %v288, 7
      %v290 = vsub.s32 %v287, %v289
      %v291 = vrot.slane %v284, %v290
      %v293 = vadd.f32 %v279, %v291
      %v294 = vld [vmem:[#allocation2] sm:$0x1]
      %vm295 = vcmp.ge.f32.partialorder %v293, 0.0
      %v297 = vlaneseq
      %v298 = vshrl.u32 %v297, 7
      %v299 = vsub.s32 0, %v298
      %v300 = vrot.slane %v294, %v299
      %301 = vset.pattern.permute.xlu0 0
      %302 = vperm.xlu0 %301, %v300
      %v303 = vpop.permute.xlu0 %302
      %v305 = vmul.f32 %v303, %v293
      %v306 = vsel %vm295, %v293, %v305
      %v307 = vld [vmem:[%s4] sm:$0xff]
      %v309 = vcombine.high %v306, %v306
      %vm310 = vcmask 31744
      %v312 = vsel %vm310, %v307, 0
      %vm314 = vcmask 1043456
      %v315 = vsel %vm314, %v306, 0
      %v317 = vsel %vm314, %v309, 0
      %319 = vmatprep.subr.mxu0 0.0
      %320 = vmatpush1.msra.mxu0 0.0
      %321 = vmatprep.subr.mxu0 0.0
      %322 = vmatpush1.msra.mxu0 0.0
      %323 = vmatprep.subr.mxu0 0.0
      %324 = vmatpush1.msra.mxu0 0.0
      %325 = vmatprep.subr.mxu0 0.0
      %326 = vmatpush1.msra.mxu0 0.0
      %327 = vmatprep.subr.mxu0 0.0
      %328 = vmatpush1.msra.mxu0 0.0
      %329 = vmatprep.subr.mxu0 0.0
      %330 = vmatpush1.msra.mxu0 0.0
      %331 = vmatprep.subr.mxu0 0.0
      %332 = vmatpush1.msra.mxu0 0.0
      %333 = vmatprep.subr.mxu0 0.0
      %334 = vmatpush1.msra.mxu0 0.0
      %335 = vmatprep.subr.mxu0 0.0
      %336 = vmatpush1.msra.mxu0 0.0
      %337 = vmatprep.subr.mxu0 0.0
      %338 = vmatpush1.msra.mxu0 0.0
      %339 = vmatprep.subr.mxu0 0.0
      %340 = vmatpush1.msra.mxu0 0.0
      %341 = vmatprep.subr.mxu0 0.0
      %342 = vmatpush1.msra.mxu0 0.0
      %343 = vmatprep.subr.mxu0 0.0
      %344 = vmatpush1.msra.mxu0 0.0
      %345 = vmatprep.subr.mxu0 0.0
      %346 = vmatpush1.msra.mxu0 0.0
      %347 = vmatprep.subr.mxu0 0.0
      %348 = vmatpush1.msra.mxu0 0.0
      %349 = vmatprep.subr.mxu0 %v317
      %350 = vmatpush1.msra.mxu0 %v315
      %351 = vmatprep.subr.mxu0 0.0
      %352 = vmatpush2.msra.mxu0 0.0
      %353 = vmatprep.subr.mxu0 0.0
      %354 = vmatpush2.msra.mxu0 0.0
      %355 = vmatprep.subr.mxu0 0.0
      %356 = vmatpush2.msra.mxu0 0.0
      %357 = vmatprep.subr.mxu0 0.0
      %358 = vmatpush2.msra.mxu0 0.0
      %359 = vmatprep.subr.mxu0 0.0
      %360 = vmatpush2.msra.mxu0 0.0
      %361 = vmatprep.subr.mxu0 0.0
      %362 = vmatpush2.msra.mxu0 0.0
      %363 = vmatprep.subr.mxu0 0.0
      %364 = vmatpush2.msra.mxu0 0.0
      %365 = vmatprep.subr.mxu0 0.0
      %366 = vmatpush2.msra.mxu0 0.0
      %367 = vmatprep.subr.mxu0 0.0
      %368 = vmatpush2.msra.mxu0 0.0
      %369 = vmatprep.subr.mxu0 0.0
      %370 = vmatpush2.msra.mxu0 0.0
      %371 = vmatprep.subr.mxu0 0.0
      %372 = vmatpush2.msra.mxu0 0.0
      %373 = vmatprep.subr.mxu0 0.0
      %374 = vmatpush2.msra.mxu0 0.0
      %375 = vmatprep.subr.mxu0 0.0
      %376 = vmatpush2.msra.mxu0 0.0
      %377 = vmatprep.subr.mxu0 0.0
      %378 = vmatpush2.msra.mxu0 0.0
      %379 = vmatprep.subr.mxu0 0.0
      %380 = vmatpush2.msra.mxu0 0.0
      %381 = vmatprep.subr.mxu0 0.0
      %382 = vmatpush2.msra.mxu0 0.0
      %383 = vmatprep.mubr.f32.mxu0 0.0
      %384 = vmatmul.mubr.f32.gmra.mxu0 %v312
      %v385 = vpop.f32.mrf.mxu0
      %v386 = vadd.f32 0.0, %v385
      %v387 = vpop.f32.mrf.mxu0
      %v388 = vadd.f32 0.0, %v387
      %389 = vdwg.mxu0
      %390 = vst [vmem:[%s260] sm:$0xff] %v386
      %391 = vst [vmem:[%s260 + $0x8] sm:$0xff] %v388
      %v392 = vadd.f32 %v386, %v388
      %393 = vadd.xlane.f32.xlu0 %v392
      %v394 = vpop.xlane.xlu0 %393
      %v395 = vmul.f32 %v386, %v386
      %v396 = vmul.f32 %v388, %v388
      %v397 = vadd.f32 %v395, %v396
      %398 = vadd.xlane.f32.xlu0 %v397
      %v399 = vpop.xlane.xlu0 %398
      %vm400 = vcmask 7168
      %v401 = vsel %vm400, %v394, %v399
      %vm402 = vcmask 15360
      %403 = vst.msk [vmem:[%s264] sm:$0xff] %vm402, %v401
      %p404 = scmp.lt.s32.totalorder %s20, 1
      %s405 = scalar_select %p404, %s20, 1
      %s406 = smul.addr %s405, 2
      %s407 = smul.addr %s406, 8
      %s408 = scalar_lea.vmem %s5, %s407
      %p409 = scmp.lt.s32.totalorder %s20, 1
      %s410 = scalar_select %p409, %s20, 1
      %s411 = smul.addr %s410, 8
      %s412 = scalar_lea.vmem %s6, %s411
      // Predicated region
      $region41: #{_lambda_.6} parent=39 // pred_check
        %p413 = pneg %p148
      $region42: #{_lambda_.6} parent=39 // pred_check_branch
        %415 = sbr.rel (%p413) target = $region44
      $region43: #{_lambda_.6} parent=39 // pred_region
        _
      $region44: #{_lambda_.6} parent=39 // pred_fallthru
        _
      // Predicated region
      $region45: #{_lambda_.6} parent=39 // pred_check
        %p416 = pneg %p174
      $region46: #{_lambda_.6} parent=39 // pred_check_branch
        %418 = sbr.rel (%p416) target = $region48
      $region47: #{_lambda_.6} parent=39 // pred_region
        _
      $region48: #{_lambda_.6} parent=39 // pred_fallthru
        _
    $region40: #{_lambda_.6} parent=5 // pred_fallthru
      _
    %p419 = scmp.le.s32.totalorder 2, %s15
    // Predicated region
    $region49: #{_lambda_.6} parent=5 // pred_check
      %p420 = pneg %p419
    $region50: #{_lambda_.6} parent=5 // pred_check_branch
      %422 = sbr.rel (%p420) target = $region52
    $region51: #{_lambda_.6} parent=5 // pred_region
      %s423 = ssub.s32 %s15, 2
      // Predicated region
      $region53: #{_lambda_.6} parent=51 // pred_check
        %p424 = pneg %p154
      $region54: #{_lambda_.6} parent=51 // pred_check_branch
        %426 = sbr.rel (%p424) target = $region56
      $region55: #{_lambda_.6} parent=51 // pred_region
        %p427 = scmp.lt.s32.totalorder %s21, 1
        %s428 = scalar_select %p427, %s21, 1
        %s429 = smul.addr %s428, 2
        %s430 = smul.addr %s429, 8
        %s431 = scalar_lea.vmem %s5, %s430
      $region56: #{_lambda_.6} parent=51 // pred_fallthru
        _
      // Predicated region
      $region57: #{_lambda_.6} parent=51 // pred_check
        %p432 = pneg %p180
      $region58: #{_lambda_.6} parent=51 // pred_check_branch
        %434 = sbr.rel (%p432) target = $region60
      $region59: #{_lambda_.6} parent=51 // pred_region
        %p435 = scmp.lt.s32.totalorder %s21, 1
        %s436 = scalar_select %p435, %s21, 1
        %s437 = smul.addr %s436, 8
        %s438 = scalar_lea.vmem %s6, %s437
      $region60: #{_lambda_.6} parent=51 // pred_fallthru
        _
    $region52: #{_lambda_.6} parent=5 // pred_fallthru
      _
  $region6: #{_lambda_.6} parent=0 // loop_footer
    %s19 = sadd.s32 1, %s15
  $region7: #{_lambda_.6} parent=0 // loop_footer_branch
    %14 = sbr.rel target = $region3
  $region8: #{_lambda_.6} parent=0 // loop_exit
    _

// kernel: _lambda_.4
$region0: #{_lambda_.4}
  #allocation0 [shape = 'u32[]', space=smem, size = 0x4, offset = 0x4, fixed_abs, tag = 'smem constant byte address 0x4 - core index']
  #allocation1 [shape = 'u32[144,128]{1,0:T(1,128)}', space=vmem, size = 0x12000, scoped, tag = 'internal scratch']
  %s0 = inlined_call_operand.vmem [shape: f32[2,4,256], index: 0, kind: input, shape index: {}]
  %s1 = inlined_call_operand.vmem [shape: f32[4,4], index: 1, kind: input, shape index: {}]
  %s2 = inlined_call_operand.vmem [shape: f32[2,4,256], index: 2, kind: output, shape index: {0}]
  %s3 = inlined_call_operand.vmem [shape: f32[2,4,2], index: 3, kind: output, shape index: {1}]
  %4 = xla_tuple %s2, %s3
  %s5 = sld [smem:[#allocation0]]
  $region49: #{_lambda_.4} parent=0
    _
  %s7 = ssub.s32 1, %s5
  %s8 = scalar_select 0, %s7, %s5
  loop: start=0, step=1, limit=4
  $region2: #{_lambda_.4} parent=0 // loop_pre_header
    _
  $region3: #{_lambda_.4} parent=0 // loop_header
    %s10 = sphi 0, %s14
    %p11 = scmp.ge.s32.totalorder %s10, 4
    %s20 = sphi 0, %s22
    %s23 = sphi 0, %s20
    %s24 = sphi 0, %s23
    %s40 = sphi 0, %s24
    %s44 = sphi 0, %s44
    %s46 = sphi 0, %s44
    %s47 = sphi 0, %s46
    %s61 = sphi 0, %s47
    %s67 = sphi 0, %s69
    %s70 = sphi 0, %s67
    %s71 = sphi 0, %s70
    %s87 = sphi 0, %s71
    %s93 = sphi 0, %s95
    %s96 = sphi 0, %s93
    %s97 = sphi 0, %s96
    %s113 = sphi 0, %s97
  $region4: #{_lambda_.4} parent=0 // loop_header_branch
    %13 = sbr.rel (%p11) target = $region8
  $region5: #{_lambda_.4} parent=0 // loop_body
    %s15 = ssub.s32 %s10, 1
    %s16 = ssub.s32 %s10, 2
    %s17 = sadd.s32 %s10, 1
    %s18 = ssub.s32 %s10, %s17
    %p19 = scmp.eq.s32.totalorder %s18, 0
    %s21 = sadd.s32 %s20, 1
    %s22 = scalar_select %p19, %s20, %s21
    %p25 = pneg %p19
    %p26 = scmp.eq.s32.totalorder %s10, 1
    %p27 = por %p25, %p26
    %p28 = scmp.ne.s32.totalorder %s20, %s23
    %p29 = scmp.eq.s32.totalorder %s10, 0
    %p30 = por %p28, %p29
    %p31 = scmp.ne.s32.totalorder %s20, %s23
    %p32 = scmp.eq.s32.totalorder %s15, 1
    %p33 = por %p31, %p32
    %p34 = scmp.ne.s32.totalorder %s23, %s24
    %p35 = scmp.eq.s32.totalorder %s15, 0
    %p36 = por %p34, %p35
    %p37 = scmp.ne.s32.totalorder %s23, %s24
    %p38 = scmp.eq.s32.totalorder %s16, 1
    %p39 = por %p37, %p38
    %p41 = scmp.ne.s32.totalorder %s24, %s40
    %p42 = scmp.eq.s32.totalorder %s16, 0
    %p43 = por %p41, %p42
    %s45 = sadd.s32 %s44, 1
    %p48 = scmp.eq.s32.totalorder %s10, 1
    %p49 = scmp.ne.s32.totalorder %s44, %s46
    %p50 = scmp.eq.s32.totalorder %s10, 0
    %p51 = por %p49, %p50
    %p52 = scmp.ne.s32.totalorder %s44, %s46
    %p53 = scmp.eq.s32.totalorder %s15, 1
    %p54 = por %p52, %p53
    %p55 = scmp.ne.s32.totalorder %s46, %s47
    %p56 = scmp.eq.s32.totalorder %s15, 0
    %p57 = por %p55, %p56
    %p58 = scmp.ne.s32.totalorder %s46, %s47
    %p59 = scmp.eq.s32.totalorder %s16, 1
    %p60 = por %p58, %p59
    %p62 = scmp.ne.s32.totalorder %s47, %s61
    %p63 = scmp.eq.s32.totalorder %s16, 0
    %p64 = por %p62, %p63
    %s65 = ssub.s32 %s10, %s17
    %p66 = scmp.eq.s32.totalorder %s65, 0
    %s68 = sadd.s32 %s67, 1
    %s69 = scalar_select %p66, %s67, %s68
    %p72 = pneg %p66
    %p73 = scmp.eq.s32.totalorder %s10, 1
    %p74 = por %p72, %p73
    %p75 = scmp.ne.s32.totalorder %s67, %s70
    %p76 = scmp.eq.s32.totalorder %s10, 0
    %p77 = por %p75, %p76
    %p78 = scmp.ne.s32.totalorder %s67, %s70
    %p79 = scmp.eq.s32.totalorder %s15, 1
    %p80 = por %p78, %p79
    %p81 = scmp.ne.s32.totalorder %s70, %s71
    %p82 = scmp.eq.s32.totalorder %s15, 0
    %p83 = por %p81, %p82
    %p84 = scmp.ne.s32.totalorder %s70, %s71
    %p85 = scmp.eq.s32.totalorder %s16, 1
    %p86 = por %p84, %p85
    %p88 = scmp.ne.s32.totalorder %s71, %s87
    %p89 = scmp.eq.s32.totalorder %s16, 0
    %p90 = por %p88, %p89
    %s91 = ssub.s32 %s10, %s17
    %p92 = scmp.eq.s32.totalorder %s91, 0
    %s94 = sadd.s32 %s93, 1
    %s95 = scalar_select %p92, %s93, %s94
    %p98 = pneg %p92
    %p99 = scmp.eq.s32.totalorder %s10, 1
    %p100 = por %p98, %p99
    %p101 = scmp.ne.s32.totalorder %s93, %s96
    %p102 = scmp.eq.s32.totalorder %s10, 0
    %p103 = por %p101, %p102
    %p104 = scmp.ne.s32.totalorder %s93, %s96
    %p105 = scmp.eq.s32.totalorder %s15, 1
    %p106 = por %p104, %p105
    %p107 = scmp.ne.s32.totalorder %s96, %s97
    %p108 = scmp.eq.s32.totalorder %s15, 0
    %p109 = por %p107, %p108
    %p110 = scmp.ne.s32.totalorder %s96, %s97
    %p111 = scmp.eq.s32.totalorder %s16, 1
    %p112 = por %p110, %p111
    %p114 = scmp.ne.s32.totalorder %s97, %s113
    %p115 = scmp.eq.s32.totalorder %s16, 0
    %p116 = por %p114, %p115
    %p117 = scmp.le.s32.totalorder 1, %s10
    %p118 = scmp.lt.s32.totalorder %s10, 3
    %p119 = pnand %p117, %p118
    %p120 = pneg %p119
    // Predicated region
    $region9: #{_lambda_.4} parent=5 // pred_check
      _
    $region10: #{_lambda_.4} parent=5 // pred_check_branch
      %122 = sbr.rel (%p119) target = $region12
    $region11: #{_lambda_.4} parent=5 // pred_region
      %s123 = ssub.s32 %s10, 1
      // Predicated region
      $region13: #{_lambda_.4} parent=11 // pred_check
        %p124 = pneg %p57
      $region14: #{_lambda_.4} parent=11 // pred_check_branch
        %126 = sbr.rel (%p124) target = $region16
      $region15: #{_lambda_.4} parent=11 // pred_region
        _
      $region16: #{_lambda_.4} parent=11 // pred_fallthru
        _
    $region12: #{_lambda_.4} parent=5 // pred_fallthru
      _
    %p127 = scmp.lt.s32.totalorder %s10, 2
    // Predicated region
    $region17: #{_lambda_.4} parent=5 // pred_check
      %p128 = pneg %p127
    $region18: #{_lambda_.4} parent=5 // pred_check_branch
      %130 = sbr.rel (%p128) target = $region20
    $region19: #{_lambda_.4} parent=5 // pred_region
      // Predicated region
      $region21: #{_lambda_.4} parent=19 // pred_check
        %p131 = pneg %p30
      $region22: #{_lambda_.4} parent=19 // pred_check_branch
        %133 = sbr.rel (%p131) target = $region24
      $region23: #{_lambda_.4} parent=19 // pred_region
        %p134 = scmp.lt.s32.totalorder %s10, 1
        %s135 = scalar_select %p134, %s10, 1
        %s136 = smul.addr %s135, 2
        %s137 = smul.addr %s136, 4
        %s138 = scalar_lea.vmem %s0, %s137
      $region24: #{_lambda_.4} parent=19 // pred_fallthru
        _
    $region20: #{_lambda_.4} parent=5 // pred_fallthru
      _
    %p139 = scmp.le.s32.totalorder 1, %s10
    %p140 = scmp.lt.s32.totalorder %s10, 3
    %p141 = pnand %p139, %p140
    %p142 = pneg %p141
    // Predicated region
    $region25: #{_lambda_.4} parent=5 // pred_check
      _
    $region26: #{_lambda_.4} parent=5 // pred_check_branch
      %144 = sbr.rel (%p141) target = $region28
    $region27: #{_lambda_.4} parent=5 // pred_region
      %s145 = ssub.s32 %s10, 1
      %p146 = scmp.lt.s32.totalorder %s15, 1
      %s147 = scalar_select %p146, %s15, 1
      %s148 = smul.addr %s147, 2
      %s149 = smul.addr %s148, 4
      %s150 = scalar_lea.vmem %s0, %s149
      %p151 = pneg %p36
      %p152 = pneg %p33
      %p153 = pneg %p57
      %p154 = pneg %p54
      %p155 = pneg %p83
      %p156 = pneg %p80
      %p157 = scmp.lt.s32.totalorder %s15, 1
      %s158 = scalar_select %p157, %s15, 1
      %s159 = smul.addr %s158, 2
      %s160 = smul.addr %s159, 4
      %s161 = scalar_lea.vmem %s2, %s160
      %p162 = pneg %p109
      %p163 = pneg %p106
      %p164 = scmp.lt.s32.totalorder %s15, 1
      %s165 = scalar_select %p164, %s15, 1
      %s166 = smul.addr %s165, 4
      %s167 = scalar_lea.vmem %s3, %s166
      %p168 = scmp.lt.s32.totalorder %s15, 1
      %s169 = scalar_select %p168, %s15, 1
      %s170 = smul.addr %s169, 2
      %s171 = smul.addr %s170, 4
      %s172 = scalar_lea.vmem %s0, %s171
      %p173 = scmp.lt.s32.totalorder %s15, 1
      %s174 = scalar_select %p173, %s15, 1
      %s175 = smul.addr %s174, 2
      %s176 = smul.addr %s175, 4
      %s177 = scalar_lea.vmem %s2, %s176
      %p178 = scmp.lt.s32.totalorder %s15, 1
      %s179 = scalar_select %p178, %s15, 1
      %s180 = smul.addr %s179, 4
      %s181 = scalar_lea.vmem %s3, %s180
      %v182 = vld [vmem:[%s172] sm:$0xff]
      %v183 = vld [vmem:[%s1] sm:$0xf]
      %v185 = vcombine.high %v182, %v182
      %vm186 = vcmask 31744
      %v188 = vsel %vm186, %v183, 0
      %vm190 = vcmask 1043456
      %v191 = vsel %vm190, %v182, 0
      %v193 = vsel %vm190, %v185, 0
      %195 = vmatprep.subr.mxu0 0.0
      %196 = vmatpush1.msra.mxu0 0.0
      %197 = vmatprep.subr.mxu0 0.0
      %198 = vmatpush1.msra.mxu0 0.0
      %199 = vmatprep.subr.mxu0 0.0
      %200 = vmatpush1.msra.mxu0 0.0
      %201 = vmatprep.subr.mxu0 0.0
      %202 = vmatpush1.msra.mxu0 0.0
      %203 = vmatprep.subr.mxu0 0.0
      %204 = vmatpush1.msra.mxu0 0.0
      %205 = vmatprep.subr.mxu0 0.0
      %206 = vmatpush1.msra.mxu0 0.0
      %207 = vmatprep.subr.mxu0 0.0
      %208 = vmatpush1.msra.mxu0 0.0
      %209 = vmatprep.subr.mxu0 0.0
      %210 = vmatpush1.msra.mxu0 0.0
      %211 = vmatprep.subr.mxu0 0.0
      %212 = vmatpush1.msra.mxu0 0.0
      %213 = vmatprep.subr.mxu0 0.0
      %214 = vmatpush1.msra.mxu0 0.0
      %215 = vmatprep.subr.mxu0 0.0
      %216 = vmatpush1.msra.mxu0 0.0
      %217 = vmatprep.subr.mxu0 0.0
      %218 = vmatpush1.msra.mxu0 0.0
      %219 = vmatprep.subr.mxu0 0.0
      %220 = vmatpush1.msra.mxu0 0.0
      %221 = vmatprep.subr.mxu0 0.0
      %222 = vmatpush1.msra.mxu0 0.0
      %223 = vmatprep.subr.mxu0 0.0
      %224 = vmatpush1.msra.mxu0 0.0
      %225 = vmatprep.subr.mxu0 %v193
      %226 = vmatpush1.msra.mxu0 %v191
      %227 = vmatprep.subr.mxu0 0.0
      %228 = vmatpush2.msra.mxu0 0.0
      %229 = vmatprep.subr.mxu0 0.0
      %230 = vmatpush2.msra.mxu0 0.0
      %231 = vmatprep.subr.mxu0 0.0
      %232 = vmatpush2.msra.mxu0 0.0
      %233 = vmatprep.subr.mxu0 0.0
      %234 = vmatpush2.msra.mxu0 0.0
      %235 = vmatprep.subr.mxu0 0.0
      %236 = vmatpush2.msra.mxu0 0.0
      %237 = vmatprep.subr.mxu0 0.0
      %238 = vmatpush2.msra.mxu0 0.0
      %239 = vmatprep.subr.mxu0 0.0
      %240 = vmatpush2.msra.mxu0 0.0
      %241 = vmatprep.subr.mxu0 0.0
      %242 = vmatpush2.msra.mxu0 0.0
      %243 = vmatprep.subr.mxu0 0.0
      %244 = vmatpush2.msra.mxu0 0.0
      %245 = vmatprep.subr.mxu0 0.0
      %246 = vmatpush2.msra.mxu0 0.0
      %247 = vmatprep.subr.mxu0 0.0
      %248 = vmatpush2.msra.mxu0 0.0
      %249 = vmatprep.subr.mxu0 0.0
      %250 = vmatpush2.msra.mxu0 0.0
      %251 = vmatprep.subr.mxu0 0.0
      %252 = vmatpush2.msra.mxu0 0.0
      %253 = vmatprep.subr.mxu0 0.0
      %254 = vmatpush2.msra.mxu0 0.0
      %255 = vmatprep.subr.mxu0 0.0
      %256 = vmatpush2.msra.mxu0 0.0
      %257 = vmatprep.subr.mxu0 0.0
      %258 = vmatpush2.msra.mxu0 0.0
      %259 = vmatprep.mubr.f32.mxu0 0.0
      %260 = vmatmul.mubr.f32.gmra.mxu0 %v188
      %v261 = vpop.f32.mrf.mxu0
      %v262 = vadd.f32 0.0, %v261
      %v263 = vpop.f32.mrf.mxu0
      %v264 = vadd.f32 0.0, %v263
      %265 = vdwg.mxu0
      %v268 = vcombine.low %v262, %v264
      %270 = vst [vmem:[%s177] sm:$0xff] %v268
      %v271 = vsel %vm190, %v262, 0.0
      %v272 = vsel %vm190, %v264, 0.0
      %v273 = vadd.f32 %v271, %v272
      %274 = vadd.xlane.f32.xlu0 %v273
      %v275 = vpop.xlane.xlu0 %274
      %v276 = vmul.f32 %v262, %v262
      %v277 = vmul.f32 %v264, %v264
      %v278 = vsel %vm190, %v276, 0.0
      %v279 = vsel %vm190, %v277, 0.0
      %v280 = vadd.f32 %v278, %v279
      %281 = vadd.xlane.f32.xlu0 %v280
      %v282 = vpop.xlane.xlu0 %281
      %vm283 = vcmask 7168
      %v284 = vsel %vm283, %v275, %v282
      %vm285 = vcmask 11264
      %286 = vst.msk [vmem:[%s181] sm:$0xf] %vm285, %v284
      %p287 = scmp.lt.s32.totalorder %s15, 1
      %s288 = scalar_select %p287, %s15, 1
      %s289 = smul.addr %s288, 2
      %s290 = smul.addr %s289, 4
      %s291 = scalar_lea.vmem %s2, %s290
      %p292 = scmp.lt.s32.totalorder %s15, 1
      %s293 = scalar_select %p292, %s15, 1
      %s294 = smul.addr %s293, 4
      %s295 = scalar_lea.vmem %s3, %s294
      // Predicated region
      $region29: #{_lambda_.4} parent=27 // pred_check
        %p296 = pneg %p80
      $region30: #{_lambda_.4} parent=27 // pred_check_branch
        %298 = sbr.rel (%p296) target = $region32
      $region31: #{_lambda_.4} parent=27 // pred_region
        _
      $region32: #{_lambda_.4} parent=27 // pred_fallthru
        _
      // Predicated region
      $region33: #{_lambda_.4} parent=27 // pred_check
        %p299 = pneg %p106
      $region34: #{_lambda_.4} parent=27 // pred_check_branch
        %301 = sbr.rel (%p299) target = $region36
      $region35: #{_lambda_.4} parent=27 // pred_region
        _
      $region36: #{_lambda_.4} parent=27 // pred_fallthru
        _
    $region28: #{_lambda_.4} parent=5 // pred_fallthru
      _
    %p302 = scmp.le.s32.totalorder 2, %s10
    // Predicated region
    $region37: #{_lambda_.4} parent=5 // pred_check
      %p303 = pneg %p302
    $region38: #{_lambda_.4} parent=5 // pred_check_branch
      %305 = sbr.rel (%p303) target = $region40
    $region39: #{_lambda_.4} parent=5 // pred_region
      %s306 = ssub.s32 %s10, 2
      // Predicated region
      $region41: #{_lambda_.4} parent=39 // pred_check
        %p307 = pneg %p86
      $region42: #{_lambda_.4} parent=39 // pred_check_branch
        %309 = sbr.rel (%p307) target = $region44
      $region43: #{_lambda_.4} parent=39 // pred_region
        %p310 = scmp.lt.s32.totalorder %s16, 1
        %s311 = scalar_select %p310, %s16, 1
        %s312 = smul.addr %s311, 2
        %s313 = smul.addr %s312, 4
        %s314 = scalar_lea.vmem %s2, %s313
      $region44: #{_lambda_.4} parent=39 // pred_fallthru
        _
      // Predicated region
      $region45: #{_lambda_.4} parent=39 // pred_check
        %p315 = pneg %p112
      $region46: #{_lambda_.4} parent=39 // pred_check_branch
        %317 = sbr.rel (%p315) target = $region48
      $region47: #{_lambda_.4} parent=39 // pred_region
        %p318 = scmp.lt.s32.totalorder %s16, 1
        %s319 = scalar_select %p318, %s16, 1
        %s320 = smul.addr %s319, 4
        %s321 = scalar_lea.vmem %s3, %s320
      $region48: #{_lambda_.4} parent=39 // pred_fallthru
        _
    $region40: #{_lambda_.4} parent=5 // pred_fallthru
      _
  $region6: #{_lambda_.4} parent=0 // loop_footer
    %s14 = sadd.s32 1, %s10
  $region7: #{_lambda_.4} parent=0 // loop_footer_branch
    %9 = sbr.rel target = $region3
  $region8: #{_lambda_.4} parent=0 // loop_exit
    _

// kernel: _lambda_.5
$region0: #{_lambda_.5}
  #allocation0 [shape = 'u32[]', space=smem, size = 0x4, offset = 0x4, fixed_abs, tag = 'smem constant byte address 0x4 - core index']
  #allocation1 [shape = 'u32[144,128]{1,0:T(1,128)}', space=vmem, size = 0x12000, scoped, tag = 'internal scratch']
  #allocation2 [shape = 'f32[1,1]{1,0:T(1,128)S(1)}', space=vmem, size = 0x200, scoped, tag = 'scoped memory for _lambda_.5']
  %s0 = inlined_call_operand.vmem [shape: f32[2,4,256], index: 0, kind: input, shape index: {}]
  %s1 = inlined_call_operand.vmem [shape: f32[4,1], index: 1, kind: input, shape index: {}]
  %s2 = inlined_call_operand.vmem [shape: f32[4,1], index: 2, kind: input, shape index: {}]
  %s3 = inlined_call_operand.<no memory space> [shape: f32[1,1], index: 3, kind: input, shape index: {}]
  %s4 = inlined_call_operand.vmem [shape: f32[4,36], index: 4, kind: input, shape index: {}]
  %s5 = inlined_call_operand.vmem [shape: f32[4,1], index: 5, kind: input, shape index: {}]
  %s6 = inlined_call_operand.vmem [shape: f32[9,256], index: 6, kind: input, shape index: {}]
  %s7 = inlined_call_operand.vmem [shape: f32[2,4,256], index: 7, kind: output, shape index: {0}]
  %s8 = inlined_call_operand.vmem [shape: f32[2,4,2], index: 8, kind: output, shape index: {1}]
  %9 = xla_tuple %s7, %s8
  %s10 = sld [smem:[#allocation0]]
  $region69: #{_lambda_.5} parent=0
    _
  %s12 = ssub.s32 1, %s10
  %s13 = scalar_select 0, %s12, %s10
  %v14 = vstv %s3
  %15 = vst [vmem:[#allocation2] sm:$0x1] %v14
  loop: start=0, step=1, limit=4
  $region2: #{_lambda_.5} parent=0 // loop_pre_header
    _
  $region3: #{_lambda_.5} parent=0 // loop_header
    %s17 = sphi 0, %s21
    %p18 = scmp.ge.s32.totalorder %s17, 4
    %s27 = sphi 0, %s29
    %s30 = sphi 0, %s27
    %s31 = sphi 0, %s30
    %s47 = sphi 0, %s31
    %s51 = sphi 0, %s51
    %s53 = sphi 0, %s51
    %s54 = sphi 0, %s53
    %s68 = sphi 0, %s54
    %s72 = sphi 0, %s72
    %s74 = sphi 0, %s72
    %s75 = sphi 0, %s74
    %s89 = sphi 0, %s75
    %s93 = sphi 0, %s93
    %s95 = sphi 0, %s93
    %s96 = sphi 0, %s95
    %s110 = sphi 0, %s96
    %s114 = sphi 0, %s114
    %s116 = sphi 0, %s114
    %s117 = sphi 0, %s116
    %s131 = sphi 0, %s117
    %s135 = sphi 0, %s135
    %s137 = sphi 0, %s135
    %s138 = sphi 0, %s137
    %s152 = sphi 0, %s138
    %s156 = sphi 0, %s156
    %s158 = sphi 0, %s156
    %s159 = sphi 0, %s158
    %s173 = sphi 0, %s159
    %s179 = sphi 0, %s181
    %s182 = sphi 0, %s179
    %s183 = sphi 0, %s182
    %s199 = sphi 0, %s183
    %s205 = sphi 0, %s207
    %s208 = sphi 0, %s205
    %s209 = sphi 0, %s208
    %s225 = sphi 0, %s209
  $region4: #{_lambda_.5} parent=0 // loop_header_branch
    %20 = sbr.rel (%p18) target = $region8
  $region5: #{_lambda_.5} parent=0 // loop_body
    %s22 = ssub.s32 %s17, 1
    %s23 = ssub.s32 %s17, 2
    %s24 = sadd.s32 %s17, 1
    %s25 = ssub.s32 %s17, %s24
    %p26 = scmp.eq.s32.totalorder %s25, 0
    %s28 = sadd.s32 %s27, 1
    %s29 = scalar_select %p26, %s27, %s28
    %p32 = pneg %p26
    %p33 = scmp.eq.s32.totalorder %s17, 1
    %p34 = por %p32, %p33
    %p35 = scmp.ne.s32.totalorder %s27, %s30
    %p36 = scmp.eq.s32.totalorder %s17, 0
    %p37 = por %p35, %p36
    %p38 = scmp.ne.s32.totalorder %s27, %s30
    %p39 = scmp.eq.s32.totalorder %s22, 1
    %p40 = por %p38, %p39
    %p41 = scmp.ne.s32.totalorder %s30, %s31
    %p42 = scmp.eq.s32.totalorder %s22, 0
    %p43 = por %p41, %p42
    %p44 = scmp.ne.s32.totalorder %s30, %s31
    %p45 = scmp.eq.s32.totalorder %s23, 1
    %p46 = por %p44, %p45
    %p48 = scmp.ne.s32.totalorder %s31, %s47
    %p49 = scmp.eq.s32.totalorder %s23, 0
    %p50 = por %p48, %p49
    %s52 = sadd.s32 %s51, 1
    %p55 = scmp.eq.s32.totalorder %s17, 1
    %p56 = scmp.ne.s32.totalorder %s51, %s53
    %p57 = scmp.eq.s32.totalorder %s17, 0
    %p58 = por %p56, %p57
    %p59 = scmp.ne.s32.totalorder %s51, %s53
    %p60 = scmp.eq.s32.totalorder %s22, 1
    %p61 = por %p59, %p60
    %p62 = scmp.ne.s32.totalorder %s53, %s54
    %p63 = scmp.eq.s32.totalorder %s22, 0
    %p64 = por %p62, %p63
    %p65 = scmp.ne.s32.totalorder %s53, %s54
    %p66 = scmp.eq.s32.totalorder %s23, 1
    %p67 = por %p65, %p66
    %p69 = scmp.ne.s32.totalorder %s54, %s68
    %p70 = scmp.eq.s32.totalorder %s23, 0
    %p71 = por %p69, %p70
    %s73 = sadd.s32 %s72, 1
    %p76 = scmp.eq.s32.totalorder %s17, 1
    %p77 = scmp.ne.s32.totalorder %s72, %s74
    %p78 = scmp.eq.s32.totalorder %s17, 0
    %p79 = por %p77, %p78
    %p80 = scmp.ne.s32.totalorder %s72, %s74
    %p81 = scmp.eq.s32.totalorder %s22, 1
    %p82 = por %p80, %p81
    %p83 = scmp.ne.s32.totalorder %s74, %s75
    %p84 = scmp.eq.s32.totalorder %s22, 0
    %p85 = por %p83, %p84
    %p86 = scmp.ne.s32.totalorder %s74, %s75
    %p87 = scmp.eq.s32.totalorder %s23, 1
    %p88 = por %p86, %p87
    %p90 = scmp.ne.s32.totalorder %s75, %s89
    %p91 = scmp.eq.s32.totalorder %s23, 0
    %p92 = por %p90, %p91
    %s94 = sadd.s32 %s93, 1
    %p97 = scmp.eq.s32.totalorder %s17, 1
    %p98 = scmp.ne.s32.totalorder %s93, %s95
    %p99 = scmp.eq.s32.totalorder %s17, 0
    %p100 = por %p98, %p99
    %p101 = scmp.ne.s32.totalorder %s93, %s95
    %p102 = scmp.eq.s32.totalorder %s22, 1
    %p103 = por %p101, %p102
    %p104 = scmp.ne.s32.totalorder %s95, %s96
    %p105 = scmp.eq.s32.totalorder %s22, 0
    %p106 = por %p104, %p105
    %p107 = scmp.ne.s32.totalorder %s95, %s96
    %p108 = scmp.eq.s32.totalorder %s23, 1
    %p109 = por %p107, %p108
    %p111 = scmp.ne.s32.totalorder %s96, %s110
    %p112 = scmp.eq.s32.totalorder %s23, 0
    %p113 = por %p111, %p112
    %s115 = sadd.s32 %s114, 1
    %p118 = scmp.eq.s32.totalorder %s17, 1
    %p119 = scmp.ne.s32.totalorder %s114, %s116
    %p120 = scmp.eq.s32.totalorder %s17, 0
    %p121 = por %p119, %p120
    %p122 = scmp.ne.s32.totalorder %s114, %s116
    %p123 = scmp.eq.s32.totalorder %s22, 1
    %p124 = por %p122, %p123
    %p125 = scmp.ne.s32.totalorder %s116, %s117
    %p126 = scmp.eq.s32.totalorder %s22, 0
    %p127 = por %p125, %p126
    %p128 = scmp.ne.s32.totalorder %s116, %s117
    %p129 = scmp.eq.s32.totalorder %s23, 1
    %p130 = por %p128, %p129
    %p132 = scmp.ne.s32.totalorder %s117, %s131
    %p133 = scmp.eq.s32.totalorder %s23, 0
    %p134 = por %p132, %p133
    %s136 = sadd.s32 %s135, 1
    %p139 = scmp.eq.s32.totalorder %s17, 1
    %p140 = scmp.ne.s32.totalorder %s135, %s137
    %p141 = scmp.eq.s32.totalorder %s17, 0
    %p142 = por %p140, %p141
    %p143 = scmp.ne.s32.totalorder %s135, %s137
    %p144 = scmp.eq.s32.totalorder %s22, 1
    %p145 = por %p143, %p144
    %p146 = scmp.ne.s32.totalorder %s137, %s138
    %p147 = scmp.eq.s32.totalorder %s22, 0
    %p148 = por %p146, %p147
    %p149 = scmp.ne.s32.totalorder %s137, %s138
    %p150 = scmp.eq.s32.totalorder %s23, 1
    %p151 = por %p149, %p150
    %p153 = scmp.ne.s32.totalorder %s138, %s152
    %p154 = scmp.eq.s32.totalorder %s23, 0
    %p155 = por %p153, %p154
    %s157 = sadd.s32 %s156, 1
    %p160 = scmp.eq.s32.totalorder %s17, 1
    %p161 = scmp.ne.s32.totalorder %s156, %s158
    %p162 = scmp.eq.s32.totalorder %s17, 0
    %p163 = por %p161, %p162
    %p164 = scmp.ne.s32.totalorder %s156, %s158
    %p165 = scmp.eq.s32.totalorder %s22, 1
    %p166 = por %p164, %p165
    %p167 = scmp.ne.s32.totalorder %s158, %s159
    %p168 = scmp.eq.s32.totalorder %s22, 0
    %p169 = por %p167, %p168
    %p170 = scmp.ne.s32.totalorder %s158, %s159
    %p171 = scmp.eq.s32.totalorder %s23, 1
    %p172 = por %p170, %p171
    %p174 = scmp.ne.s32.totalorder %s159, %s173
    %p175 = scmp.eq.s32.totalorder %s23, 0
    %p176 = por %p174, %p175
    %s177 = ssub.s32 %s17, %s24
    %p178 = scmp.eq.s32.totalorder %s177, 0
    %s180 = sadd.s32 %s179, 1
    %s181 = scalar_select %p178, %s179, %s180
    %p184 = pneg %p178
    %p185 = scmp.eq.s32.totalorder %s17, 1
    %p186 = por %p184, %p185
    %p187 = scmp.ne.s32.totalorder %s179, %s182
    %p188 = scmp.eq.s32.totalorder %s17, 0
    %p189 = por %p187, %p188
    %p190 = scmp.ne.s32.totalorder %s179, %s182
    %p191 = scmp.eq.s32.totalorder %s22, 1
    %p192 = por %p190, %p191
    %p193 = scmp.ne.s32.totalorder %s182, %s183
    %p194 = scmp.eq.s32.totalorder %s22, 0
    %p195 = por %p193, %p194
    %p196 = scmp.ne.s32.totalorder %s182, %s183
    %p197 = scmp.eq.s32.totalorder %s23, 1
    %p198 = por %p196, %p197
    %p200 = scmp.ne.s32.totalorder %s183, %s199
    %p201 = scmp.eq.s32.totalorder %s23, 0
    %p202 = por %p200, %p201
    %s203 = ssub.s32 %s17, %s24
    %p204 = scmp.eq.s32.totalorder %s203, 0
    %s206 = sadd.s32 %s205, 1
    %s207 = scalar_select %p204, %s205, %s206
    %p210 = pneg %p204
    %p211 = scmp.eq.s32.totalorder %s17, 1
    %p212 = por %p210, %p211
    %p213 = scmp.ne.s32.totalorder %s205, %s208
    %p214 = scmp.eq.s32.totalorder %s17, 0
    %p215 = por %p213, %p214
    %p216 = scmp.ne.s32.totalorder %s205, %s208
    %p217 = scmp.eq.s32.totalorder %s22, 1
    %p218 = por %p216, %p217
    %p219 = scmp.ne.s32.totalorder %s208, %s209
    %p220 = scmp.eq.s32.totalorder %s22, 0
    %p221 = por %p219, %p220
    %p222 = scmp.ne.s32.totalorder %s208, %s209
    %p223 = scmp.eq.s32.totalorder %s23, 1
    %p224 = por %p222, %p223
    %p226 = scmp.ne.s32.totalorder %s209, %s225
    %p227 = scmp.eq.s32.totalorder %s23, 0
    %p228 = por %p226, %p227
    %p229 = scmp.le.s32.totalorder 1, %s17
    %p230 = scmp.lt.s32.totalorder %s17, 3
    %p231 = pnand %p229, %p230
    %p232 = pneg %p231
    // Predicated region
    $region9: #{_lambda_.5} parent=5 // pred_check
      _
    $region10: #{_lambda_.5} parent=5 // pred_check_branch
      %234 = sbr.rel (%p231) target = $region12
    $region11: #{_lambda_.5} parent=5 // pred_region
      %s235 = ssub.s32 %s17, 1
      // Predicated region
      $region13: #{_lambda_.5} parent=11 // pred_check
        %p236 = pneg %p64
      $region14: #{_lambda_.5} parent=11 // pred_check_branch
        %238 = sbr.rel (%p236) target = $region16
      $region15: #{_lambda_.5} parent=11 // pred_region
        _
      $region16: #{_lambda_.5} parent=11 // pred_fallthru
        _
      // Predicated region
      $region17: #{_lambda_.5} parent=11 // pred_check
        %p239 = pneg %p85
      $region18: #{_lambda_.5} parent=11 // pred_check_branch
        %241 = sbr.rel (%p239) target = $region20
      $region19: #{_lambda_.5} parent=11 // pred_region
        _
      $region20: #{_lambda_.5} parent=11 // pred_fallthru
        _
      // Predicated region
      $region21: #{_lambda_.5} parent=11 // pred_check
        %p242 = pneg %p106
      $region22: #{_lambda_.5} parent=11 // pred_check_branch
        %244 = sbr.rel (%p242) target = $region24
      $region23: #{_lambda_.5} parent=11 // pred_region
        _
      $region24: #{_lambda_.5} parent=11 // pred_fallthru
        _
      // Predicated region
      $region25: #{_lambda_.5} parent=11 // pred_check
        %p245 = pneg %p127
      $region26: #{_lambda_.5} parent=11 // pred_check_branch
        %247 = sbr.rel (%p245) target = $region28
      $region27: #{_lambda_.5} parent=11 // pred_region
        _
      $region28: #{_lambda_.5} parent=11 // pred_fallthru
        _
      // Predicated region
      $region29: #{_lambda_.5} parent=11 // pred_check
        %p248 = pneg %p148
      $region30: #{_lambda_.5} parent=11 // pred_check_branch
        %250 = sbr.rel (%p248) target = $region32
      $region31: #{_lambda_.5} parent=11 // pred_region
        _
      $region32: #{_lambda_.5} parent=11 // pred_fallthru
        _
      // Predicated region
      $region33: #{_lambda_.5} parent=11 // pred_check
        %p251 = pneg %p169
      $region34: #{_lambda_.5} parent=11 // pred_check_branch
        %253 = sbr.rel (%p251) target = $region36
      $region35: #{_lambda_.5} parent=11 // pred_region
        _
      $region36: #{_lambda_.5} parent=11 // pred_fallthru
        _
    $region12: #{_lambda_.5} parent=5 // pred_fallthru
      _
    %p254 = scmp.lt.s32.totalorder %s17, 2
    // Predicated region
    $region37: #{_lambda_.5} parent=5 // pred_check
      %p255 = pneg %p254
    $region38: #{_lambda_.5} parent=5 // pred_check_branch
      %257 = sbr.rel (%p255) target = $region40
    $region39: #{_lambda_.5} parent=5 // pred_region
      // Predicated region
      $region41: #{_lambda_.5} parent=39 // pred_check
        %p258 = pneg %p37
      $region42: #{_lambda_.5} parent=39 // pred_check_branch
        %260 = sbr.rel (%p258) target = $region44
      $region43: #{_lambda_.5} parent=39 // pred_region
        %p261 = scmp.lt.s32.totalorder %s17, 1
        %s262 = scalar_select %p261, %s17, 1
        %s263 = smul.addr %s262, 2
        %s264 = smul.addr %s263, 4
        %s265 = scalar_lea.vmem %s0, %s264
      $region44: #{_lambda_.5} parent=39 // pred_fallthru
        _
    $region40: #{_lambda_.5} parent=5 // pred_fallthru
      _
    %p266 = scmp.le.s32.totalorder 1, %s17
    %p267 = scmp.lt.s32.totalorder %s17, 3
    %p268 = pnand %p266, %p267
    %p269 = pneg %p268
    // Predicated region
    $region45: #{_lambda_.5} parent=5 // pred_check
      _
    $region46: #{_lambda_.5} parent=5 // pred_check_branch
      %271 = sbr.rel (%p268) target = $region48
    $region47: #{_lambda_.5} parent=5 // pred_region
      %s272 = ssub.s32 %s17, 1
      %p273 = scmp.lt.s32.totalorder %s22, 1
      %s274 = scalar_select %p273, %s22, 1
      %s275 = smul.addr %s274, 2
      %s276 = smul.addr %s275, 4
      %s277 = scalar_lea.vmem %s0, %s276
      %p278 = pneg %p43
      %p279 = pneg %p40
      %p280 = pneg %p64
      %p281 = pneg %p61
      %p282 = pneg %p85
      %p283 = pneg %p82
      %p284 = pneg %p106
      %p285 = pneg %p103
      %p286 = pneg %p127
      %p287 = pneg %p124
      %p288 = pneg %p148
      %p289 = pneg %p145
      %p290 = pneg %p169
      %p291 = pneg %p166
      %p292 = pneg %p195
      %p293 = pneg %p192
      %p294 = scmp.lt.s32.totalorder %s22, 1
      %s295 = scalar_select %p294, %s22, 1
      %s296 = smul.addr %s295, 2
      %s297 = smul.addr %s296, 4
      %s298 = scalar_lea.vmem %s7, %s297
      %p299 = pneg %p221
      %p300 = pneg %p218
      %p301 = scmp.lt.s32.totalorder %s22, 1
      %s302 = scalar_select %p301, %s22, 1
      %s303 = smul.addr %s302, 4
      %s304 = scalar_lea.vmem %s8, %s303
      %p305 = scmp.lt.s32.totalorder %s22, 1
      %s306 = scalar_select %p305, %s22, 1
      %s307 = smul.addr %s306, 2
      %s308 = smul.addr %s307, 4
      %s309 = scalar_lea.vmem %s0, %s308
      %p310 = scmp.lt.s32.totalorder %s22, 1
      %s311 = scalar_select %p310, %s22, 1
      %s312 = smul.addr %s311, 2
      %s313 = smul.addr %s312, 4
      %s314 = scalar_lea.vmem %s7, %s313
      %p315 = scmp.lt.s32.totalorder %s22, 1
      %s316 = scalar_select %p315, %s22, 1
      %s317 = smul.addr %s316, 4
      %s318 = scalar_lea.vmem %s8, %s317
      %v319 = vld [vmem:[%s309] sm:$0xff]
      %v320 = vld [vmem:[%s1] sm:$0xf]
      %322 = vset.pattern.permute.xlu0 0
      %323 = vperm.xlu0 %322, %v320
      %v324 = vpop.permute.xlu0 %323
      %v326 = vunpack.c.l.s4 839922192
      %v327 = vunpack.c.0.s8 %v326
      %v328 = vlaneseq
      %v329 = vshrl.u32 %v328, 7
      %v330 = vsub.s32 %v327, %v329
      %v331 = vrot.slane %v324, %v330
      %v333 = vmul.f32 %v319, %v331
      %v334 = vld [vmem:[%s2] sm:$0xf]
      %336 = vset.pattern.permute.xlu0 0
      %337 = vperm.xlu0 %336, %v334
      %v338 = vpop.permute.xlu0 %337
      %v340 = vunpack.c.l.s4 839922192
      %v341 = vunpack.c.0.s8 %v340
      %v342 = vlaneseq
      %v343 = vshrl.u32 %v342, 7
      %v344 = vsub.s32 %v341, %v343
      %v345 = vrot.slane %v338, %v344
      %v347 = vadd.f32 %v333, %v345
      %v348 = vld [vmem:[#allocation2] sm:$0x1]
      %vm349 = vcmp.ge.f32.partialorder %v347, 0.0
      %v351 = vlaneseq
      %v352 = vshrl.u32 %v351, 7
      %v353 = vsub.s32 0, %v352
      %v354 = vrot.slane %v348, %v353
      %355 = vset.pattern.permute.xlu0 0
      %356 = vperm.xlu0 %355, %v354
      %v357 = vpop.permute.xlu0 %356
      %v359 = vmul.f32 %v357, %v347
      %v360 = vsel %vm349, %v347, %v359
      %v362 = vcombine.high %v360, %v360
      %363 = vrot.lane.b32.xlu0 %v362, 17
      %v364 = vpop.permute.xlu0 %363
      %366 = vrot.lane.b32.xlu0 %v360, 17
      %v367 = vpop.permute.xlu0 %366
      %vm368 = vcmask 138240
      %v369 = vsel %vm368, %v367, %v364
      %v372 = vsel %vm368, %v364, %v367
      %v373 = vld [vmem:[%s6] ss:$8 sm:$0x3]
      %v375 = vlaneseq
      %v376 = vshrl.u32 %v375, 7
      %v377 = vsub.s32 0, %v376
      %v378 = vrot.slane %v373, %v377
      %v379 = vlaneseq
      %v380 = vshrl.u32 %v379, 7
      %v381 = vsub.s32 1, %v380
      %v382 = vrot.slane %v373, %v381
      %v385 = vmul.f32 %v372, %v378
      %v386 = vmul.f32 %v369, %v382
      %387 = vrot.lane.b32.xlu0 %v362, 16
      %v388 = vpop.permute.xlu0 %387
      %390 = vrot.lane.b32.xlu0 %v360, 16
      %v391 = vpop.permute.xlu0 %390
      %vm392 = vcmask 130048
      %v393 = vsel %vm392, %v391, %v388
      %v396 = vsel %vm392, %v388, %v391
      %s397 = scalar_lea.vmem %s6, 1
      %v398 = vld [vmem:[%s397] ss:$8 sm:$0x3]
      %v400 = vlaneseq
      %v401 = vshrl.u32 %v400, 7
      %v402 = vsub.s32 0, %v401
      %v403 = vrot.slane %v398, %v402
      %v404 = vlaneseq
      %v405 = vshrl.u32 %v404, 7
      %v406 = vsub.s32 1, %v405
      %v407 = vrot.slane %v398, %v406
      %v410 = vmul.f32 %v396, %v403
      %v411 = vmul.f32 %v393, %v407
      %412 = vrot.lane.b32.xlu0 %v362, 15
      %v413 = vpop.permute.xlu0 %412
      %415 = vrot.lane.b32.xlu0 %v360, 15
      %v416 = vpop.permute.xlu0 %415
      %vm417 = vcmask 121856
      %v418 = vsel %vm417, %v416, %v413
      %v421 = vsel %vm417, %v413, %v416
      %s422 = scalar_lea.vmem %s6, 2
      %v423 = vld [vmem:[%s422] ss:$8 sm:$0x3]
      %v425 = vlaneseq
      %v426 = vshrl.u32 %v425, 7
      %v427 = vsub.s32 0, %v426
      %v428 = vrot.slane %v423, %v427
      %v429 = vlaneseq
      %v430 = vshrl.u32 %v429, 7
      %v431 = vsub.s32 1, %v430
      %v432 = vrot.slane %v423, %v431
      %v435 = vmul.f32 %v421, %v428
      %v436 = vmul.f32 %v418, %v432
      %437 = vrot.lane.b32.xlu0 %v362, 1
      %v438 = vpop.permute.xlu0 %437
      %440 = vrot.lane.b32.xlu0 %v360, 1
      %v441 = vpop.permute.xlu0 %440
      %vm442 = vcmask 7168
      %v443 = vsel %vm442, %v441, %v438
      %v446 = vsel %vm442, %v438, %v441
      %s447 = scalar_lea.vmem %s6, 3
      %v448 = vld [vmem:[%s447] ss:$8 sm:$0x3]
      %v450 = vlaneseq
      %v451 = vshrl.u32 %v450, 7
      %v452 = vsub.s32 0, %v451
      %v453 = vrot.slane %v448, %v452
      %v454 = vlaneseq
      %v455 = vshrl.u32 %v454, 7
      %v456 = vsub.s32 1, %v455
      %v457 = vrot.slane %v448, %v456
      %v460 = vmul.f32 %v446, %v453
      %v461 = vmul.f32 %v443, %v457
      %462 = vrot.lane.b32.xlu0 %v360, 127
      %v463 = vpop.permute.xlu0 %462
      %464 = vrot.lane.b32.xlu0 %v362, 127
      %v465 = vpop.permute.xlu0 %464
      %vm466 = vcmask 1039360
      %v467 = vsel %vm466, %v463, %v465
      %v471 = vsel %vm466, %v465, %v463
      %s472 = scalar_lea.vmem %s6, 5
      %v473 = vld [vmem:[%s472] ss:$8 sm:$0x3]
      %v475 = vlaneseq
      %v476 = vshrl.u32 %v475, 7
      %v477 = vsub.s32 0, %v476
      %v478 = vrot.slane %v473, %v477
      %v479 = vlaneseq
      %v480 = vshrl.u32 %v479, 7
      %v481 = vsub.s32 1, %v480
      %v482 = vrot.slane %v473, %v481
      %v485 = vmul.f32 %v467, %v478
      %v486 = vmul.f32 %v471, %v482
      %487 = vrot.lane.b32.xlu0 %v360, 113
      %v488 = vpop.permute.xlu0 %487
      %489 = vrot.lane.b32.xlu0 %v362, 113
      %v490 = vpop.permute.xlu0 %489
      %vm491 = vcmask 924672
      %v492 = vsel %vm491, %v488, %v490
      %v496 = vsel %vm491, %v490, %v488
      %s497 = scalar_lea.vmem %s6, 6
      %v498 = vld [vmem:[%s497] ss:$8 sm:$0x3]
      %v500 = vlaneseq
      %v501 = vshrl.u32 %v500, 7
      %v502 = vsub.s32 0, %v501
      %v503 = vrot.slane %v498, %v502
      %v504 = vlaneseq
      %v505 = vshrl.u32 %v504, 7
      %v506 = vsub.s32 1, %v505
      %v507 = vrot.slane %v498, %v506
      %v510 = vmul.f32 %v492, %v503
      %v511 = vmul.f32 %v496, %v507
      %512 = vrot.lane.b32.xlu0 %v360, 112
      %v513 = vpop.permute.xlu0 %512
      %514 = vrot.lane.b32.xlu0 %v362, 112
      %v515 = vpop.permute.xlu0 %514
      %vm516 = vcmask 916480
      %v517 = vsel %vm516, %v513, %v515
      %v521 = vsel %vm516, %v515, %v513
      %s522 = scalar_lea.vmem %s6, 7
      %v523 = vld [vmem:[%s522] ss:$8 sm:$0x3]
      %v525 = vlaneseq
      %v526 = vshrl.u32 %v525, 7
      %v527 = vsub.s32 0, %v526
      %v528 = vrot.slane %v523, %v527
      %v529 = vlaneseq
      %v530 = vshrl.u32 %v529, 7
      %v531 = vsub.s32 1, %v530
      %v532 = vrot.slane %v523, %v531
      %v535 = vmul.f32 %v517, %v528
      %v536 = vmul.f32 %v521, %v532
      %537 = vrot.lane.b32.xlu0 %v360, 111
      %v538 = vpop.permute.xlu0 %537
      %539 = vrot.lane.b32.xlu0 %v362, 111
      %v540 = vpop.permute.xlu0 %539
      %vm541 = vcmask 908288
      %v542 = vsel %vm541, %v538, %v540
      %v546 = vsel %vm541, %v540, %v538
      %s547 = scalar_lea.vmem %s6, 16
      %v548 = vld [vmem:[%s547] ss:$8 sm:$0x3]
      %v550 = vlaneseq
      %v551 = vshrl.u32 %v550, 7
      %v552 = vsub.s32 0, %v551
      %v553 = vrot.slane %v548, %v552
      %v554 = vlaneseq
      %v555 = vshrl.u32 %v554, 7
      %v556 = vsub.s32 1, %v555
      %v557 = vrot.slane %v548, %v556
      %v560 = vmul.f32 %v542, %v553
      %v561 = vmul.f32 %v546, %v557
      %v564 = vrot.slane %v410, 4
      %v565 = vrot.slane %v411, 4
      %v570 = vrot.slane %v460, 4
      %v571 = vrot.slane %v461, 4
      %v577 = vrot.slane %v485, 4
      %v578 = vrot.slane %v486, 4
      %v583 = vrot.slane %v535, 4
      %v584 = vrot.slane %v536, 4
      %vm587 = vcmask 1043456
      %v588 = vsel %vm587, %v385, %v564
      %v589 = vsel %vm587, %v386, %v565
      %v590 = vsel %vm587, %v435, %v570
      %v591 = vsel %vm587, %v436, %v571
      %v592 = vsel %vm587, %v360, %v577
      %v593 = vsel %vm587, %v362, %v578
      %v594 = vsel %vm587, %v510, %v583
      %v595 = vsel %vm587, %v511, %v584
      %v596 = vld [vmem:[%s4] sm:$0xf]
      %v597 = vld [vmem:[%s5] sm:$0xf]
      %599 = vset.pattern.permute.xlu0 0
      %600 = vperm.xlu0 %599, %v597
      %v601 = vpop.permute.xlu0 %600
      %vm603 = vcmask 293888
      %v605 = vsel %vm603, %v596, 0
      %v608 = vsel %vm587, %v560, 0
      %v611 = vsel %vm587, %v561, 0
      %613 = vmatprep.subr.mxu0 0.0
      %614 = vmatpush1.msra.mxu0 0.0
      %615 = vmatprep.subr.mxu0 0.0
      %616 = vmatpush1.msra.mxu0 0.0
      %617 = vmatprep.subr.mxu0 0.0
      %618 = vmatpush1.msra.mxu0 0.0
      %619 = vmatprep.subr.mxu0 0.0
      %620 = vmatpush1.msra.mxu0 0.0
      %621 = vmatprep.subr.mxu0 0.0
      %622 = vmatpush1.msra.mxu0 0.0
      %623 = vmatprep.subr.mxu0 0.0
      %624 = vmatpush1.msra.mxu0 0.0
      %625 = vmatprep.subr.mxu0 0.0
      %626 = vmatpush1.msra.mxu0 0.0
      %627 = vmatprep.subr.mxu0 0.0
      %628 = vmatpush1.msra.mxu0 0.0
      %629 = vmatprep.subr.mxu0 0.0
      %630 = vmatpush1.msra.mxu0 0.0
      %631 = vmatprep.subr.mxu0 0.0
      %632 = vmatpush1.msra.mxu0 0.0
      %633 = vmatprep.subr.mxu0 0.0
      %634 = vmatpush1.msra.mxu0 0.0
      %635 = vmatprep.subr.mxu0 %v611
      %636 = vmatpush1.msra.mxu0 %v608
      %637 = vmatprep.subr.mxu0 %v595
      %638 = vmatpush1.msra.mxu0 %v594
      %639 = vmatprep.subr.mxu0 %v593
      %640 = vmatpush1.msra.mxu0 %v592
      %641 = vmatprep.subr.mxu0 %v591
      %642 = vmatpush1.msra.mxu0 %v590
      %643 = vmatprep.subr.mxu0 %v589
      %644 = vmatpush1.msra.mxu0 %v588
      %645 = vmatprep.subr.mxu0 0.0
      %646 = vmatpush2.msra.mxu0 0.0
      %647 = vmatprep.subr.mxu0 0.0
      %648 = vmatpush2.msra.mxu0 0.0
      %649 = vmatprep.subr.mxu0 0.0
      %650 = vmatpush2.msra.mxu0 0.0
      %651 = vmatprep.subr.mxu0 0.0
      %652 = vmatpush2.msra.mxu0 0.0
      %653 = vmatprep.subr.mxu0 0.0
      %654 = vmatpush2.msra.mxu0 0.0
      %655 = vmatprep.subr.mxu0 0.0
      %656 = vmatpush2.msra.mxu0 0.0
      %657 = vmatprep.subr.mxu0 0.0
      %658 = vmatpush2.msra.mxu0 0.0
      %659 = vmatprep.subr.mxu0 0.0
      %660 = vmatpush2.msra.mxu0 0.0
      %661 = vmatprep.subr.mxu0 0.0
      %662 = vmatpush2.msra.mxu0 0.0
      %663 = vmatprep.subr.mxu0 0.0
      %664 = vmatpush2.msra.mxu0 0.0
      %665 = vmatprep.subr.mxu0 0.0
      %666 = vmatpush2.msra.mxu0 0.0
      %667 = vmatprep.subr.mxu0 0.0
      %668 = vmatpush2.msra.mxu0 0.0
      %669 = vmatprep.subr.mxu0 0.0
      %670 = vmatpush2.msra.mxu0 0.0
      %671 = vmatprep.subr.mxu0 0.0
      %672 = vmatpush2.msra.mxu0 0.0
      %673 = vmatprep.subr.mxu0 0.0
      %674 = vmatpush2.msra.mxu0 0.0
      %675 = vmatprep.subr.mxu0 0.0
      %676 = vmatpush2.msra.mxu0 0.0
      %677 = vmatprep.mubr.f32.mxu0 0.0
      %678 = vmatmul.mubr.f32.gmra.mxu0 %v605
      %v679 = vpop.f32.mrf.mxu0
      %v680 = vadd.f32 %v601, %v679
      %v681 = vpop.f32.mrf.mxu0
      %v682 = vadd.f32 %v601, %v681
      %683 = vdwg.mxu0
      %v686 = vcombine.low %v680, %v682
      %688 = vst [vmem:[%s314] sm:$0xff] %v686
      %v689 = vsel %vm587, %v680, 0.0
      %v690 = vsel %vm587, %v682, 0.0
      %v691 = vadd.f32 %v689, %v690
      %692 = vadd.xlane.f32.xlu0 %v691
      %v693 = vpop.xlane.xlu0 %692
      %v694 = vmul.f32 %v680, %v680
      %v695 = vmul.f32 %v682, %v682
      %v696 = vsel %vm587, %v694, 0.0
      %v697 = vsel %vm587, %v695, 0.0
      %v698 = vadd.f32 %v696, %v697
      %699 = vadd.xlane.f32.xlu0 %v698
      %v700 = vpop.xlane.xlu0 %699
      %v701 = vsel %vm442, %v693, %v700
      %vm702 = vcmask 11264
      %703 = vst.msk [vmem:[%s318] sm:$0xf] %vm702, %v701
      %p704 = scmp.lt.s32.totalorder %s22, 1
      %s705 = scalar_select %p704, %s22, 1
      %s706 = smul.addr %s705, 2
      %s707 = smul.addr %s706, 4
      %s708 = scalar_lea.vmem %s7, %s707
      %p709 = scmp.lt.s32.totalorder %s22, 1
      %s710 = scalar_select %p709, %s22, 1
      %s711 = smul.addr %s710, 4
      %s712 = scalar_lea.vmem %s8, %s711
      // Predicated region
      $region49: #{_lambda_.5} parent=47 // pred_check
        %p713 = pneg %p192
      $region50: #{_lambda_.5} parent=47 // pred_check_branch
        %715 = sbr.rel (%p713) target = $region52
      $region51: #{_lambda_.5} parent=47 // pred_region
        _
      $region52: #{_lambda_.5} parent=47 // pred_fallthru
        _
      // Predicated region
      $region53: #{_lambda_.5} parent=47 // pred_check
        %p716 = pneg %p218
      $region54: #{_lambda_.5} parent=47 // pred_check_branch
        %718 = sbr.rel (%p716) target = $region56
      $region55: #{_lambda_.5} parent=47 // pred_region
        _
      $region56: #{_lambda_.5} parent=47 // pred_fallthru
        _
    $region48: #{_lambda_.5} parent=5 // pred_fallthru
      _
    %p719 = scmp.le.s32.totalorder 2, %s17
    // Predicated region
    $region57: #{_lambda_.5} parent=5 // pred_check
      %p720 = pneg %p719
    $region58: #{_lambda_.5} parent=5 // pred_check_branch
      %722 = sbr.rel (%p720) target = $region60
    $region59: #{_lambda_.5} parent=5 // pred_region
      %s723 = ssub.s32 %s17, 2
      // Predicated region
      $region61: #{_lambda_.5} parent=59 // pred_check
        %p724 = pneg %p198
      $region62: #{_lambda_.5} parent=59 // pred_check_branch
        %726 = sbr.rel (%p724) target = $region64
      $region63: #{_lambda_.5} parent=59 // pred_region
        %p727 = scmp.lt.s32.totalorder %s23, 1
        %s728 = scalar_select %p727, %s23, 1
        %s729 = smul.addr %s728, 2
        %s730 = smul.addr %s729, 4
        %s731 = scalar_lea.vmem %s7, %s730
      $region64: #{_lambda_.5} parent=59 // pred_fallthru
        _
      // Predicated region
      $region65: #{_lambda_.5} parent=59 // pred_check
        %p732 = pneg %p224
      $region66: #{_lambda_.5} parent=59 // pred_check_branch
        %734 = sbr.rel (%p732) target = $region68
      $region67: #{_lambda_.5} parent=59 // pred_region
        %p735 = scmp.lt.s32.totalorder %s23, 1
        %s736 = scalar_select %p735, %s23, 1
        %s737 = smul.addr %s736, 4
        %s738 = scalar_lea.vmem %s8, %s737
      $region68: #{_lambda_.5} parent=59 // pred_fallthru
        _
    $region60: #{_lambda_.5} parent=5 // pred_fallthru
      _
  $region6: #{_lambda_.5} parent=0 // loop_footer
    %s21 = sadd.s32 1, %s17
  $region7: #{_lambda_.5} parent=0 // loop_footer_branch
    %16 = sbr.rel target = $region3
  $region8: #{_lambda_.5} parent=0 // loop_exit
    _

// kernel: _lambda_.7
$region0: #{_lambda_.7}
  #allocation0 [shape = 'u32[]', space=smem, size = 0x4, offset = 0x4, fixed_abs, tag = 'smem constant byte address 0x4 - core index']
  #allocation1 [shape = 'u32[144,128]{1,0:T(1,128)}', space=vmem, size = 0x12000, scoped, tag = 'internal scratch']
  #allocation2 [shape = 'f32[1,1]{1,0:T(1,128)S(1)}', space=vmem, size = 0x200, scoped, tag = 'scoped memory for _lambda_.7']
  %s0 = inlined_call_operand.vmem [shape: f32[2,8,256], index: 0, kind: input, shape index: {}]
  %s1 = inlined_call_operand.vmem [shape: f32[8,1], index: 1, kind: input, shape index: {}]
  %s2 = inlined_call_operand.vmem [shape: f32[8,1], index: 2, kind: input, shape index: {}]
  %s3 = inlined_call_operand.vmem [shape: f32[2,4,256], index: 3, kind: input, shape index: {}]
  %s4 = inlined_call_operand.<no memory space> [shape: f32[1,1], index: 4, kind: input, shape index: {}]
  %s5 = inlined_call_operand.vmem [shape: f32[2,8,256], index: 5, kind: output, shape index: {}]
  %s6 = sld [smem:[#allocation0]]
  $region53: #{_lambda_.7} parent=0
    _
  %s8 = ssub.s32 1, %s6
  %s9 = scalar_select 0, %s8, %s6
  %v10 = vstv %s4
  %11 = vst [vmem:[#allocation2] sm:$0x1] %v10
  loop: start=0, step=1, limit=4
  $region2: #{_lambda_.7} parent=0 // loop_pre_header
    _
  $region3: #{_lambda_.7} parent=0 // loop_header
    %s13 = sphi 0, %s17
    %p14 = scmp.ge.s32.totalorder %s13, 4
    %s23 = sphi 0, %s25
    %s26 = sphi 0, %s23
    %s27 = sphi 0, %s26
    %s43 = sphi 0, %s27
    %s47 = sphi 0, %s47
    %s49 = sphi 0, %s47
    %s50 = sphi 0, %s49
    %s64 = sphi 0, %s50
    %s68 = sphi 0, %s68
    %s70 = sphi 0, %s68
    %s71 = sphi 0, %s70
    %s85 = sphi 0, %s71
    %s91 = sphi 0, %s93
    %s94 = sphi 0, %s91
    %s95 = sphi 0, %s94
    %s111 = sphi 0, %s95
    %s115 = sphi 0, %s115
    %s117 = sphi 0, %s115
    %s118 = sphi 0, %s117
    %s132 = sphi 0, %s118
    %s138 = sphi 0, %s140
    %s141 = sphi 0, %s138
    %s142 = sphi 0, %s141
    %s158 = sphi 0, %s142
  $region4: #{_lambda_.7} parent=0 // loop_header_branch
    %16 = sbr.rel (%p14) target = $region8
  $region5: #{_lambda_.7} parent=0 // loop_body
    %s18 = ssub.s32 %s13, 1
    %s19 = ssub.s32 %s13, 2
    %s20 = sadd.s32 %s13, 1
    %s21 = ssub.s32 %s13, %s20
    %p22 = scmp.eq.s32.totalorder %s21, 0
    %s24 = sadd.s32 %s23, 1
    %s25 = scalar_select %p22, %s23, %s24
    %p28 = pneg %p22
    %p29 = scmp.eq.s32.totalorder %s13, 1
    %p30 = por %p28, %p29
    %p31 = scmp.ne.s32.totalorder %s23, %s26
    %p32 = scmp.eq.s32.totalorder %s13, 0
    %p33 = por %p31, %p32
    %p34 = scmp.ne.s32.totalorder %s23, %s26
    %p35 = scmp.eq.s32.totalorder %s18, 1
    %p36 = por %p34, %p35
    %p37 = scmp.ne.s32.totalorder %s26, %s27
    %p38 = scmp.eq.s32.totalorder %s18, 0
    %p39 = por %p37, %p38
    %p40 = scmp.ne.s32.totalorder %s26, %s27
    %p41 = scmp.eq.s32.totalorder %s19, 1
    %p42 = por %p40, %p41
    %p44 = scmp.ne.s32.totalorder %s27, %s43
    %p45 = scmp.eq.s32.totalorder %s19, 0
    %p46 = por %p44, %p45
    %s48 = sadd.s32 %s47, 1
    %p51 = scmp.eq.s32.totalorder %s13, 1
    %p52 = scmp.ne.s32.totalorder %s47, %s49
    %p53 = scmp.eq.s32.totalorder %s13, 0
    %p54 = por %p52, %p53
    %p55 = scmp.ne.s32.totalorder %s47, %s49
    %p56 = scmp.eq.s32.totalorder %s18, 1
    %p57 = por %p55, %p56
    %p58 = scmp.ne.s32.totalorder %s49, %s50
    %p59 = scmp.eq.s32.totalorder %s18, 0
    %p60 = por %p58, %p59
    %p61 = scmp.ne.s32.totalorder %s49, %s50
    %p62 = scmp.eq.s32.totalorder %s19, 1
    %p63 = por %p61, %p62
    %p65 = scmp.ne.s32.totalorder %s50, %s64
    %p66 = scmp.eq.s32.totalorder %s19, 0
    %p67 = por %p65, %p66
    %s69 = sadd.s32 %s68, 1
    %p72 = scmp.eq.s32.totalorder %s13, 1
    %p73 = scmp.ne.s32.totalorder %s68, %s70
    %p74 = scmp.eq.s32.totalorder %s13, 0
    %p75 = por %p73, %p74
    %p76 = scmp.ne.s32.totalorder %s68, %s70
    %p77 = scmp.eq.s32.totalorder %s18, 1
    %p78 = por %p76, %p77
    %p79 = scmp.ne.s32.totalorder %s70, %s71
    %p80 = scmp.eq.s32.totalorder %s18, 0
    %p81 = por %p79, %p80
    %p82 = scmp.ne.s32.totalorder %s70, %s71
    %p83 = scmp.eq.s32.totalorder %s19, 1
    %p84 = por %p82, %p83
    %p86 = scmp.ne.s32.totalorder %s71, %s85
    %p87 = scmp.eq.s32.totalorder %s19, 0
    %p88 = por %p86, %p87
    %s89 = ssub.s32 %s13, %s20
    %p90 = scmp.eq.s32.totalorder %s89, 0
    %s92 = sadd.s32 %s91, 1
    %s93 = scalar_select %p90, %s91, %s92
    %p96 = pneg %p90
    %p97 = scmp.eq.s32.totalorder %s13, 1
    %p98 = por %p96, %p97
    %p99 = scmp.ne.s32.totalorder %s91, %s94
    %p100 = scmp.eq.s32.totalorder %s13, 0
    %p101 = por %p99, %p100
    %p102 = scmp.ne.s32.totalorder %s91, %s94
    %p103 = scmp.eq.s32.totalorder %s18, 1
    %p104 = por %p102, %p103
    %p105 = scmp.ne.s32.totalorder %s94, %s95
    %p106 = scmp.eq.s32.totalorder %s18, 0
    %p107 = por %p105, %p106
    %p108 = scmp.ne.s32.totalorder %s94, %s95
    %p109 = scmp.eq.s32.totalorder %s19, 1
    %p110 = por %p108, %p109
    %p112 = scmp.ne.s32.totalorder %s95, %s111
    %p113 = scmp.eq.s32.totalorder %s19, 0
    %p114 = por %p112, %p113
    %s116 = sadd.s32 %s115, 1
    %p119 = scmp.eq.s32.totalorder %s13, 1
    %p120 = scmp.ne.s32.totalorder %s115, %s117
    %p121 = scmp.eq.s32.totalorder %s13, 0
    %p122 = por %p120, %p121
    %p123 = scmp.ne.s32.totalorder %s115, %s117
    %p124 = scmp.eq.s32.totalorder %s18, 1
    %p125 = por %p123, %p124
    %p126 = scmp.ne.s32.totalorder %s117, %s118
    %p127 = scmp.eq.s32.totalorder %s18, 0
    %p128 = por %p126, %p127
    %p129 = scmp.ne.s32.totalorder %s117, %s118
    %p130 = scmp.eq.s32.totalorder %s19, 1
    %p131 = por %p129, %p130
    %p133 = scmp.ne.s32.totalorder %s118, %s132
    %p134 = scmp.eq.s32.totalorder %s19, 0
    %p135 = por %p133, %p134
    %s136 = ssub.s32 %s13, %s20
    %p137 = scmp.eq.s32.totalorder %s136, 0
    %s139 = sadd.s32 %s138, 1
    %s140 = scalar_select %p137, %s138, %s139
    %p143 = pneg %p137
    %p144 = scmp.eq.s32.totalorder %s13, 1
    %p145 = por %p143, %p144
    %p146 = scmp.ne.s32.totalorder %s138, %s141
    %p147 = scmp.eq.s32.totalorder %s13, 0
    %p148 = por %p146, %p147
    %p149 = scmp.ne.s32.totalorder %s138, %s141
    %p150 = scmp.eq.s32.totalorder %s18, 1
    %p151 = por %p149, %p150
    %p152 = scmp.ne.s32.totalorder %s141, %s142
    %p153 = scmp.eq.s32.totalorder %s18, 0
    %p154 = por %p152, %p153
    %p155 = scmp.ne.s32.totalorder %s141, %s142
    %p156 = scmp.eq.s32.totalorder %s19, 1
    %p157 = por %p155, %p156
    %p159 = scmp.ne.s32.totalorder %s142, %s158
    %p160 = scmp.eq.s32.totalorder %s19, 0
    %p161 = por %p159, %p160
    %p162 = scmp.le.s32.totalorder 1, %s13
    %p163 = scmp.lt.s32.totalorder %s13, 3
    %p164 = pnand %p162, %p163
    %p165 = pneg %p164
    // Predicated region
    $region9: #{_lambda_.7} parent=5 // pred_check
      _
    $region10: #{_lambda_.7} parent=5 // pred_check_branch
      %167 = sbr.rel (%p164) target = $region12
    $region11: #{_lambda_.7} parent=5 // pred_region
      %s168 = ssub.s32 %s13, 1
      // Predicated region
      $region13: #{_lambda_.7} parent=11 // pred_check
        %p169 = pneg %p60
      $region14: #{_lambda_.7} parent=11 // pred_check_branch
        %171 = sbr.rel (%p169) target = $region16
      $region15: #{_lambda_.7} parent=11 // pred_region
        _
      $region16: #{_lambda_.7} parent=11 // pred_fallthru
        _
      // Predicated region
      $region17: #{_lambda_.7} parent=11 // pred_check
        %p172 = pneg %p81
      $region18: #{_lambda_.7} parent=11 // pred_check_branch
        %174 = sbr.rel (%p172) target = $region20
      $region19: #{_lambda_.7} parent=11 // pred_region
        _
      $region20: #{_lambda_.7} parent=11 // pred_fallthru
        _
      // Predicated region
      $region21: #{_lambda_.7} parent=11 // pred_check
        %p175 = pneg %p128
      $region22: #{_lambda_.7} parent=11 // pred_check_branch
        %177 = sbr.rel (%p175) target = $region24
      $region23: #{_lambda_.7} parent=11 // pred_region
        _
      $region24: #{_lambda_.7} parent=11 // pred_fallthru
        _
    $region12: #{_lambda_.7} parent=5 // pred_fallthru
      _
    %p178 = scmp.lt.s32.totalorder %s13, 2
    // Predicated region
    $region25: #{_lambda_.7} parent=5 // pred_check
      %p179 = pneg %p178
    $region26: #{_lambda_.7} parent=5 // pred_check_branch
      %181 = sbr.rel (%p179) target = $region28
    $region27: #{_lambda_.7} parent=5 // pred_region
      // Predicated region
      $region29: #{_lambda_.7} parent=27 // pred_check
        %p182 = pneg %p33
      $region30: #{_lambda_.7} parent=27 // pred_check_branch
        %184 = sbr.rel (%p182) target = $region32
      $region31: #{_lambda_.7} parent=27 // pred_region
        %p185 = scmp.lt.s32.totalorder %s13, 1
        %s186 = scalar_select %p185, %s13, 1
        %s187 = smul.addr %s186, 2
        %s188 = smul.addr %s187, 8
        %s189 = scalar_lea.vmem %s0, %s188
      $region32: #{_lambda_.7} parent=27 // pred_fallthru
        _
      // Predicated region
      $region33: #{_lambda_.7} parent=27 // pred_check
        %p190 = pneg %p101
      $region34: #{_lambda_.7} parent=27 // pred_check_branch
        %192 = sbr.rel (%p190) target = $region36
      $region35: #{_lambda_.7} parent=27 // pred_region
        %p193 = scmp.lt.s32.totalorder %s13, 1
        %s194 = scalar_select %p193, %s13, 1
        %s195 = smul.addr %s194, 2
        %s196 = smul.addr %s195, 4
        %s197 = scalar_lea.vmem %s3, %s196
      $region36: #{_lambda_.7} parent=27 // pred_fallthru
        _
    $region28: #{_lambda_.7} parent=5 // pred_fallthru
      _
    %p198 = scmp.le.s32.totalorder 1, %s13
    %p199 = scmp.lt.s32.totalorder %s13, 3
    %p200 = pnand %p198, %p199
    %p201 = pneg %p200
    // Predicated region
    $region37: #{_lambda_.7} parent=5 // pred_check
      _
    $region38: #{_lambda_.7} parent=5 // pred_check_branch
      %203 = sbr.rel (%p200) target = $region40
    $region39: #{_lambda_.7} parent=5 // pred_region
      %s204 = ssub.s32 %s13, 1
      %p205 = scmp.lt.s32.totalorder %s18, 1
      %s206 = scalar_select %p205, %s18, 1
      %s207 = smul.addr %s206, 2
      %s208 = smul.addr %s207, 8
      %s209 = scalar_lea.vmem %s0, %s208
      %p210 = pneg %p39
      %p211 = pneg %p36
      %p212 = pneg %p60
      %p213 = pneg %p57
      %p214 = pneg %p81
      %p215 = pneg %p78
      %p216 = scmp.lt.s32.totalorder %s18, 1
      %s217 = scalar_select %p216, %s18, 1
      %s218 = smul.addr %s217, 2
      %s219 = smul.addr %s218, 4
      %s220 = scalar_lea.vmem %s3, %s219
      %p221 = pneg %p107
      %p222 = pneg %p104
      %p223 = pneg %p128
      %p224 = pneg %p125
      %p225 = pneg %p154
      %p226 = pneg %p151
      %p227 = scmp.lt.s32.totalorder %s18, 1
      %s228 = scalar_select %p227, %s18, 1
      %s229 = smul.addr %s228, 2
      %s230 = smul.addr %s229, 8
      %s231 = scalar_lea.vmem %s5, %s230
      %p232 = scmp.lt.s32.totalorder %s18, 1
      %s233 = scalar_select %p232, %s18, 1
      %s234 = smul.addr %s233, 2
      %s235 = smul.addr %s234, 8
      %s236 = scalar_lea.vmem %s0, %s235
      %p237 = scmp.lt.s32.totalorder %s18, 1
      %s238 = scalar_select %p237, %s18, 1
      %s239 = smul.addr %s238, 2
      %s240 = smul.addr %s239, 4
      %s241 = scalar_lea.vmem %s3, %s240
      %p242 = scmp.lt.s32.totalorder %s18, 1
      %s243 = scalar_select %p242, %s18, 1
      %s244 = smul.addr %s243, 2
      %s245 = smul.addr %s244, 8
      %s246 = scalar_lea.vmem %s5, %s245
      %v247 = vld [vmem:[%s236] sm:$0xff]
      %v248 = vld [vmem:[%s236 + $0x8] sm:$0xff]
      %v249 = vld [vmem:[%s1] sm:$0xff]
      %251 = vset.pattern.permute.xlu0 0
      %252 = vperm.xlu0 %251, %v249
      %v253 = vpop.permute.xlu0 %252
      %v255 = vmul.f32 %v247, %v253
      %v256 = vmul.f32 %v248, %v253
      %v257 = vld [vmem:[%s2] sm:$0xff]
      %259 = vset.pattern.permute.xlu0 0
      %260 = vperm.xlu0 %259, %v257
      %v261 = vpop.permute.xlu0 %260
      %v263 = vadd.f32 %v255, %v261
      %v264 = vadd.f32 %v256, %v261
      %v265 = vld [vmem:[%s241] sm:$0xff]
      %v267 = vcombine.high %v265, %v265
      %v269 = vcombine.low %v265, %v265
      %vm271 = vcmask 1043456
      %v272 = vsel %vm271, %v265, %v269
      %v273 = vsel %vm271, %v267, %v265
      %v274 = vadd.f32 %v263, %v272
      %v275 = vadd.f32 %v264, %v273
      %v276 = vld [vmem:[#allocation2] sm:$0x1]
      %vm277 = vcmp.ge.f32.partialorder %v274, 0.0
      %vm278 = vcmp.ge.f32.partialorder %v275, 0.0
      %v280 = vlaneseq
      %v281 = vshrl.u32 %v280, 7
      %v282 = vsub.s32 0, %v281
      %v283 = vrot.slane %v276, %v282
      %284 = vset.pattern.permute.xlu0 0
      %285 = vperm.xlu0 %284, %v283
      %v286 = vpop.permute.xlu0 %285
      %v288 = vmul.f32 %v286, %v274
      %v289 = vmul.f32 %v286, %v275
      %v290 = vsel %vm277, %v274, %v288
      %v291 = vsel %vm278, %v275, %v289
      %292 = vst [vmem:[%s246] sm:$0xff] %v290
      %293 = vst [vmem:[%s246 + $0x8] sm:$0xff] %v291
      %p294 = scmp.lt.s32.totalorder %s18, 1
      %s295 = scalar_select %p294, %s18, 1
      %s296 = smul.addr %s295, 2
      %s297 = smul.addr %s296, 8
      %s298 = scalar_lea.vmem %s5, %s297
      // Predicated region
      $region41: #{_lambda_.7} parent=39 // pred_check
        %p299 = pneg %p151
      $region42: #{_lambda_.7} parent=39 // pred_check_branch
        %301 = sbr.rel (%p299) target = $region44
      $region43: #{_lambda_.7} parent=39 // pred_region
        _
      $region44: #{_lambda_.7} parent=39 // pred_fallthru
        _
    $region40: #{_lambda_.7} parent=5 // pred_fallthru
      _
    %p302 = scmp.le.s32.totalorder 2, %s13
    // Predicated region
    $region45: #{_lambda_.7} parent=5 // pred_check
      %p303 = pneg %p302
    $region46: #{_lambda_.7} parent=5 // pred_check_branch
      %305 = sbr.rel (%p303) target = $region48
    $region47: #{_lambda_.7} parent=5 // pred_region
      %s306 = ssub.s32 %s13, 2
      // Predicated region
      $region49: #{_lambda_.7} parent=47 // pred_check
        %p307 = pneg %p157
      $region50: #{_lambda_.7} parent=47 // pred_check_branch
        %309 = sbr.rel (%p307) target = $region52
      $region51: #{_lambda_.7} parent=47 // pred_region
        %p310 = scmp.lt.s32.totalorder %s19, 1
        %s311 = scalar_select %p310, %s19, 1
        %s312 = smul.addr %s311, 2
        %s313 = smul.addr %s312, 8
        %s314 = scalar_lea.vmem %s5, %s313
      $region52: #{_lambda_.7} parent=47 // pred_fallthru
        _
    $region48: #{_lambda_.7} parent=5 // pred_fallthru
      _
  $region6: #{_lambda_.7} parent=0 // loop_footer
    %s17 = sadd.s32 1, %s13
  $region7: #{_lambda_.7} parent=0 // loop_footer_branch
    %12 = sbr.rel target = $region3
  $region8: #{_lambda_.7} parent=0 // loop_exit
    _

</llo_original>
